<compile_context>
chip_gen: v6e
topology: v6e:2x2x1
jax: 0.10.0
libtpu: 0.0.40
codegen_flags: <defaults>
</compile_context>

<pallas_src>
import functools
import numpy as np
import jax
import jax.numpy as jnp
from jax.experimental import pallas as pl
from jax.experimental.pallas import tpu as pltpu


# ----------------------------- schedule (glue) -------------------------------
def create_schedule(num_timesteps, sigma_min=0.002, sigma_max=1.0, rho=7.0):
    """Karras-style noise schedule (numpy, static)."""
    i = np.arange(num_timesteps, dtype=np.float64)
    s = (sigma_max ** (1.0 / rho)
         + i / max(num_timesteps - 1, 1)
         * (sigma_min ** (1.0 / rho) - sigma_max ** (1.0 / rho))) ** rho
    return s


def _precond_scalars(num_timesteps, sigma_data):
    t = create_schedule(num_timesteps)
    sigma = float(t[0])
    c_skip = float(sigma_data ** 2 / (sigma ** 2 + sigma_data ** 2))
    c_out = float(sigma * sigma_data / np.sqrt(sigma ** 2 + sigma_data ** 2))
    c_in = float(1.0 / np.sqrt(sigma ** 2 + sigma_data ** 2))
    return c_skip, c_out, c_in


def _round_up(x, m):
    return (x + m - 1) // m * m


def _prepare_fused_params(params, c_skip, c_out, c_in, Cp):
    """Fold EDM preconditioning + skip into fused (lower|upper) conv weights.

    Returns:
      w_fused (2C, 9*Cp) f32 : heads fused on the output (row) axis, scaled by
                               c_in*c_out, input channels zero-padded to Cp,
                               with c_skip*I added (exactly, in f32) to the
                               center tap (k = 4). Column layout is tap-major
                               (col = k*Cp + in_channel).
      bias    (2C, 1)    f32 : fused bias scaled by c_out.
    """
    wl, bl, wu, bu = params                     # (9,C,C),(1,C),(9,C,C),(1,C)
    C = wl.shape[-1]
    w = jnp.concatenate([wl, wu], axis=-1).astype(jnp.float32) * (c_in * c_out)
    w = jnp.pad(w, ((0, 0), (0, Cp - C), (0, 0)))                 # (9, Cp, 2C)
    eye = jnp.eye(Cp, dtype=jnp.float32)[:, :C]                   # (Cp, C)
    skip = jnp.concatenate([eye, eye], axis=-1) * c_skip          # (Cp, 2C)
    w = w.at[4].add(skip)                       # center tap carries the skip
    w_fused = jnp.transpose(w, (2, 0, 1)).reshape(2 * C, 9 * Cp)  # (2C, 9Cp) f32
    bias = jnp.concatenate([bl, bu], axis=-1).astype(jnp.float32) * c_out
    return w_fused, bias.reshape(2 * C, 1)


def _pick_tile_h(H, W, C, Cp, vmem_budget_bytes=12 << 20):
    """Largest row-tile height whose double-buffered footprint fits the budget.

    Prefers TH == H (whole image per grid step: no halo duplication and maximum
    work per step). The 12 MiB default fits v5e's 16 MiB scoped-VMEM default
    and leaves ample headroom on v7x (64 MiB physical).
    """
    Wp = W + 2

    def footprint(th):
        l_out = _round_up(th * Wp, 128)
        l_in = _round_up(l_out + 2 * Wp + 2, 128)
        b_in = Cp * l_in * 2                               # bf16 image tile
        b_out = 2 * C * l_out * 4                          # f32 fused output
        b_tmp = 9 * Cp * l_out * 4 + 2 * C * l_out * 4     # taps + matmul out
        return 2 * (b_in + b_out) + b_tmp                  # double-buffered I/O

    if footprint(H) <= vmem_budget_bytes:
        return H
    best = 0
    for th in range(8, H, 8):
        if H % th == 0 and footprint(th) <= vmem_budget_bytes:
            best = th
    return best if best > 0 else H


# ------------------------------- Pallas kernel --------------------------------
def _conffusion_kernel(x_ref, w_ref, b_ref, o_ref, *, Wp, L_out):
    """One (batch, row-tile) grid step.

    x_ref: (Cp, L_in)   bf16  padded rows flattened onto the lane axis.
    w_ref: (2C, 9*Cp)   f32   fused weights (precond + skip folded, tap-major).
    b_ref: (2C, 1)      f32   fused bias (already scaled by c_out).
    o_ref: (2C, L_out)  f32   L_out is a multiple of 128 (lane-dense stores);
                              lanes >= TH*Wp and image columns w >= W are junk
                              dropped by the wrapper.
    """
    # Nine 3x3 taps = static shifted lane windows of the resident tile, cast to
    # f32 and stacked channel-wise (sublane-tile aligned since Cp % 8 == 0)
    # -> a single (9*Cp, L_out) operand -> ONE MXU matmul.
    taps = jnp.concatenate(
        [x_ref[:, dy * Wp + dx: dy * Wp + dx + L_out].astype(jnp.float32)
         for dy in range(3) for dx in range(3)], axis=0)
    d = jnp.dot(w_ref[...], taps,
                precision=jax.lax.Precision.HIGHEST,
                preferred_element_type=jnp.float32)            # (2C, L_out)
    # f32 epilogue: bias + clamp(-1, 1) (lower/upper heads fused on rows).
    o_ref[...] = jnp.clip(d + b_ref[...], -1.0, 1.0).astype(o_ref.dtype)


# --------------------------------- wrapper ------------------------------------
def conffusion_forward(x_nchw, params, *, num_timesteps=8, sigma_data=0.5,
                       tile_h=None, out_dtype=jnp.float32):
    """Conffusion.forward: returns (predicted_l, predicted_u), NCHW, clamped."""
    B, C, H, W = x_nchw.shape
    c_skip, c_out, c_in = _precond_scalars(num_timesteps, sigma_data)
    Cp = _round_up(C, 8)
    w_fused, bias = _prepare_fused_params(params, c_skip, c_out, c_in, Cp)

    TH = tile_h if tile_h is not None else _pick_tile_h(H, W, C, Cp)
    assert H % TH == 0, "H must be divisible by the row-tile height"
    nH = H // TH
    Wp = W + 2
    L_out = _round_up(TH * Wp, 128)            # lane-dense (unmasked) stores
    L_in = _round_up(L_out + 2 * Wp + 2, 128)

    # Channels-first end-to-end; pad once (channels to Cp, spatial halo), then
    # flatten padded rows onto the lane axis.
    x = x_nchw.astype(jnp.float32)
    xpad = jnp.pad(x, ((0, 0), (0, Cp - C), (1, 1), (1, 1)))   # (B,Cp,H+2,W+2)
    if nH == 1:
        xt = xpad.reshape(B, 1, Cp, (H + 2) * Wp)              # no halo copies
    else:
        # TODO(synk): for images too tall for VMEM (nH > 1) the overlapping
        # halo row tiles are still materialized host-side; a manual-DMA
        # (pl.ANY) halo gather would remove this extra HBM pass.
        xt = jnp.stack(
            [xpad[:, :, i * TH:i * TH + TH + 2, :].reshape(B, Cp, (TH + 2) * Wp)
             for i in range(nH)], axis=1)
    xt = jnp.pad(xt, ((0, 0), (0, 0), (0, 0), (0, L_in - xt.shape[-1])))
    xt = xt.astype(jnp.bfloat16)               # bf16 streaming; f32 compute

    kernel = functools.partial(_conffusion_kernel, Wp=Wp, L_out=L_out)

    out = pl.pallas_call(
        kernel,
        out_shape=jax.ShapeDtypeStruct((B, 2 * C, nH * L_out), out_dtype),
        grid=(B, nH),
        in_specs=[
            pl.BlockSpec((None, None, Cp, L_in), lambda b, i: (b, i, 0, 0)),
            pl.BlockSpec((2 * C, 9 * Cp), lambda b, i: (0, 0)),
            pl.BlockSpec((2 * C, 1), lambda b, i: (0, 0)),
        ],
        out_specs=pl.BlockSpec((None, 2 * C, L_out), lambda b, i: (b, 0, i)),
        compiler_params=pltpu.CompilerParams(
            dimension_semantics=("parallel", "parallel")),
    )(xt, w_fused, bias)

    # Output is already channel-major: only free reshapes + junk-column slices.
    out = out.reshape(B, 2 * C, nH, L_out)[..., :TH * Wp]
    out = out.reshape(B, 2 * C, nH, TH, Wp)[..., :W].reshape(B, 2 * C, H, W)
    return out[:, :C], out[:, C:]


# ------------------------- pure-JAX references (check) -------------------------
def conffusion_forward_ref_fused(x_nchw, params, *, num_timesteps=8,
                                 sigma_data=0.5):
    """Reference using the SAME f32 fused params and bf16-rounded image that
    the kernel consumes (only matmul pass/accumulation order may differ)."""
    B, C, H, W = x_nchw.shape
    c_skip, c_out, c_in = _precond_scalars(num_timesteps, sigma_data)
    Cp = _round_up(C, 8)
    w_fused, bias = _prepare_fused_params(params, c_skip, c_out, c_in, Cp)
    w = w_fused.reshape(2 * C, 9, Cp)                         # (out, k, in)
    xb = x_nchw.astype(jnp.bfloat16).astype(jnp.float32)
    xb = jnp.pad(xb, ((0, 0), (0, Cp - C), (0, 0), (0, 0)))
    xpad = jnp.pad(xb, ((0, 0), (0, 0), (1, 1), (1, 1)))
    acc = jnp.zeros((B, 2 * C, H, W), jnp.float32)
    for dy in range(3):
        for dx in range(3):
            k = dy * 3 + dx
            acc = acc + jnp.einsum('oi,bihw->bohw', w[:, k, :],
                                   xpad[:, :, dy:dy + H, dx:dx + W],
                                   precision=jax.lax.Precision.HIGHEST)
    d = jnp.clip(acc + bias.reshape(1, 2 * C, 1, 1), -1.0, 1.0)
    return d[:, :C], d[:, C:]


def conffusion_forward_ref_f32(x_nchw, params, *, num_timesteps=8,
                               sigma_data=0.5):
    """Original (unfused, full-f32) semantics: precondition -> conv -> clamp."""
    wl, bl, wu, bu = params
    B, C, H, W = x_nchw.shape
    c_skip, c_out, c_in = _precond_scalars(num_timesteps, sigma_data)
    x = x_nchw.astype(jnp.float32)
    xpad = jnp.pad(c_in * x, ((0, 0), (0, 0), (1, 1), (1, 1)))

    def conv(w, b):
        acc = jnp.zeros((B, C, H, W), jnp.float32)
        for dy in range(3):
            for dx in range(3):
                k = dy * 3 + dx
                acc = acc + jnp.einsum('io,bihw->bohw', w[k],
                                       xpad[:, :, dy:dy + H, dx:dx + W],
                                       precision=jax.lax.Precision.HIGHEST)
        return acc + b[0].reshape(1, C, 1, 1)

    d_l = jnp.clip(c_skip * x + c_out * conv(wl, bl), -1.0, 1.0)
    d_u = jnp.clip(c_skip * x + c_out * conv(wu, bu), -1.0, 1.0)
    return d_l, d_u


# ----------------------------------- main --------------------------------------
if __name__ == "__main__":
    B, C, H, W = 2, 4, 16, 16

    key = jax.random.PRNGKey(0)
    k_wl, k_bl, k_wu, k_bu, k_x = jax.random.split(key, 5)
    wl = jax.random.normal(k_wl, (9, C, C), jnp.float32) * 0.1
    bl = jax.random.normal(k_bl, (1, C), jnp.float32) * 0.01
    wu = jax.random.normal(k_wu, (9, C, C), jnp.float32) * 0.1
    bu = jax.random.normal(k_bu, (1, C), jnp.float32) * 0.01
    params = (wl, bl, wu, bu)

    masked_images = jax.random.normal(k_x, (B, C, H, W), jnp.float32)

    fwd = jax.jit(conffusion_forward)
    pred_l, pred_u = fwd(masked_images, params)
    pred_l = jax.block_until_ready(pred_l)
    pred_u = jax.block_until_ready(pred_u)
    assert pred_l.shape == (B, C, H, W) and pred_u.shape == (B, C, H, W)

    # Check against a reference that uses the identical f32 fused params and
    # bf16-rounded input (tolerance covers generations where the f32 MXU path
    # is pass-decomposed at reduced precision).
    ref_l, ref_u = conffusion_forward_ref_fused(masked_images, params)
    np.testing.assert_allclose(np.asarray(pred_l), np.asarray(ref_l),
                               rtol=1e-2, atol=1e-2)
    np.testing.assert_allclose(np.asarray(pred_u), np.asarray(ref_u),
                               rtol=1e-2, atol=1e-2)

    # Looser check against the original unfused full-f32 semantics (the only
    # extra error source is bf16 streaming of the image).
    f32_l, f32_u = conffusion_forward_ref_f32(masked_images, params)
    np.testing.assert_allclose(np.asarray(pred_l), np.asarray(f32_l),
                               rtol=2.5e-2, atol=2.5e-2)
    np.testing.assert_allclose(np.asarray(pred_u), np.asarray(f32_u),
                               rtol=2.5e-2, atol=2.5e-2)

    print("KERNEL_OK")
</pallas_src>

<mosaic_0001>
module attributes {stable_mosaic.version = 11 : i64} {
  func.func @_conffusion_kernel(%arg0: i32, %arg1: i32, %arg2: memref<1x1x8x512xbf16, #tpu.memory_space<vmem>>, %arg3: memref<8x72xf32, #tpu.memory_space<vmem>>, %arg4: memref<8x1xf32, #tpu.memory_space<vmem>>, %arg5: memref<1x8x384xf32, #tpu.memory_space<vmem>>) attributes {dimension_semantics = [#tpu.dimension_semantics<parallel>, #tpu.dimension_semantics<parallel>], iteration_bounds = array<i64: 2, 1>, scalar_prefetch = 0 : i64, scratch_operands = 0 : i64, tpu.core_type = #tpu.core_type<tc>, window_params = [{transform_indices = @transform_0, window_bounds = array<i64: 1, 1, 8, 512>}, {pipeline_mode = #tpu.pipeline_mode<synchronous>, transform_indices = @transform_1, window_bounds = array<i64: 8, 72>}, {pipeline_mode = #tpu.pipeline_mode<synchronous>, transform_indices = @transform_2, window_bounds = array<i64: 8, 1>}, {transform_indices = @transform_3, window_bounds = array<i64: 1, 8, 384>}]} {
    %c0 = arith.constant 0 : index
    %c0_0 = arith.constant 0 : index
    %c0_1 = arith.constant 0 : index
    %c0_2 = arith.constant 0 : index
    %0 = vector.load %arg2[%c0, %c0_0, %c0_1, %c0_2] : memref<1x1x8x512xbf16, #tpu.memory_space<vmem>>, vector<1x1x8x384xbf16>
    %1 = vector.shape_cast %0 : vector<1x1x8x384xbf16> to vector<8x384xbf16>
    %2 = arith.extf %1 : vector<8x384xbf16> to vector<8x384xf32>
    %c0_3 = arith.constant 0 : index
    %c0_4 = arith.constant 0 : index
    %c0_5 = arith.constant 0 : index
    %c1 = arith.constant 1 : index
    %3 = vector.load %arg2[%c0_3, %c0_4, %c0_5, %c1] : memref<1x1x8x512xbf16, #tpu.memory_space<vmem>>, vector<1x1x8x384xbf16>
    %4 = vector.shape_cast %3 : vector<1x1x8x384xbf16> to vector<8x384xbf16>
    %5 = arith.extf %4 : vector<8x384xbf16> to vector<8x384xf32>
    %c0_6 = arith.constant 0 : index
    %c0_7 = arith.constant 0 : index
    %c0_8 = arith.constant 0 : index
    %c2 = arith.constant 2 : index
    %6 = vector.load %arg2[%c0_6, %c0_7, %c0_8, %c2] : memref<1x1x8x512xbf16, #tpu.memory_space<vmem>>, vector<1x1x8x384xbf16>
    %7 = vector.shape_cast %6 : vector<1x1x8x384xbf16> to vector<8x384xbf16>
    %8 = arith.extf %7 : vector<8x384xbf16> to vector<8x384xf32>
    %c0_9 = arith.constant 0 : index
    %c0_10 = arith.constant 0 : index
    %c0_11 = arith.constant 0 : index
    %c18 = arith.constant 18 : index
    %9 = vector.load %arg2[%c0_9, %c0_10, %c0_11, %c18] : memref<1x1x8x512xbf16, #tpu.memory_space<vmem>>, vector<1x1x8x384xbf16>
    %10 = vector.shape_cast %9 : vector<1x1x8x384xbf16> to vector<8x384xbf16>
    %11 = arith.extf %10 : vector<8x384xbf16> to vector<8x384xf32>
    %c0_12 = arith.constant 0 : index
    %c0_13 = arith.constant 0 : index
    %c0_14 = arith.constant 0 : index
    %c19 = arith.constant 19 : index
    %12 = vector.load %arg2[%c0_12, %c0_13, %c0_14, %c19] : memref<1x1x8x512xbf16, #tpu.memory_space<vmem>>, vector<1x1x8x384xbf16>
    %13 = vector.shape_cast %12 : vector<1x1x8x384xbf16> to vector<8x384xbf16>
    %14 = arith.extf %13 : vector<8x384xbf16> to vector<8x384xf32>
    %c0_15 = arith.constant 0 : index
    %c0_16 = arith.constant 0 : index
    %c0_17 = arith.constant 0 : index
    %c20 = arith.constant 20 : index
    %15 = vector.load %arg2[%c0_15, %c0_16, %c0_17, %c20] : memref<1x1x8x512xbf16, #tpu.memory_space<vmem>>, vector<1x1x8x384xbf16>
    %16 = vector.shape_cast %15 : vector<1x1x8x384xbf16> to vector<8x384xbf16>
    %17 = arith.extf %16 : vector<8x384xbf16> to vector<8x384xf32>
    %c0_18 = arith.constant 0 : index
    %c0_19 = arith.constant 0 : index
    %c0_20 = arith.constant 0 : index
    %c36 = arith.constant 36 : index
    %18 = vector.load %arg2[%c0_18, %c0_19, %c0_20, %c36] : memref<1x1x8x512xbf16, #tpu.memory_space<vmem>>, vector<1x1x8x384xbf16>
    %19 = vector.shape_cast %18 : vector<1x1x8x384xbf16> to vector<8x384xbf16>
    %20 = arith.extf %19 : vector<8x384xbf16> to vector<8x384xf32>
    %c0_21 = arith.constant 0 : index
    %c0_22 = arith.constant 0 : index
    %c0_23 = arith.constant 0 : index
    %c37 = arith.constant 37 : index
    %21 = vector.load %arg2[%c0_21, %c0_22, %c0_23, %c37] : memref<1x1x8x512xbf16, #tpu.memory_space<vmem>>, vector<1x1x8x384xbf16>
    %22 = vector.shape_cast %21 : vector<1x1x8x384xbf16> to vector<8x384xbf16>
    %23 = arith.extf %22 : vector<8x384xbf16> to vector<8x384xf32>
    %c0_24 = arith.constant 0 : index
    %c0_25 = arith.constant 0 : index
    %c0_26 = arith.constant 0 : index
    %c38 = arith.constant 38 : index
    %24 = vector.load %arg2[%c0_24, %c0_25, %c0_26, %c38] : memref<1x1x8x512xbf16, #tpu.memory_space<vmem>>, vector<1x1x8x384xbf16>
    %25 = vector.shape_cast %24 : vector<1x1x8x384xbf16> to vector<8x384xbf16>
    %26 = arith.extf %25 : vector<8x384xbf16> to vector<8x384xf32>
    %27 = tpu.concatenate %2, %5, %8, %11, %14, %17, %20, %23, %26 in 0 : vector<8x384xf32>, vector<8x384xf32>, vector<8x384xf32>, vector<8x384xf32>, vector<8x384xf32>, vector<8x384xf32>, vector<8x384xf32>, vector<8x384xf32>, vector<8x384xf32> -> vector<72x384xf32>
    %c0_27 = arith.constant 0 : index
    %c0_28 = arith.constant 0 : index
    %28 = vector.load %arg3[%c0_27, %c0_28] : memref<8x72xf32, #tpu.memory_space<vmem>>, vector<8x72xf32>
    %cst = arith.constant dense<0.000000e+00> : vector<8x384xf32>
    %29 = tpu.matmul %28, %27, %cst {dimension_numbers = #tpu.dot_dimension_numbers<[1], [0], [0], [1], [0, 0, 1, 1], [], []>, precision = #tpu.contract_precision<fp32>} : vector<8x72xf32>, vector<72x384xf32>, vector<8x384xf32> -> vector<8x384xf32>
    %c0_29 = arith.constant 0 : index
    %c0_30 = arith.constant 0 : index
    %30 = vector.load %arg4[%c0_29, %c0_30] : memref<8x1xf32, #tpu.memory_space<vmem>>, vector<8x1xf32>
    %31 = vector.broadcast %30 : vector<8x1xf32> to vector<8x384xf32>
    %32 = arith.addf %29, %31 : vector<8x384xf32>
    %cst_31 = arith.constant -1.000000e+00 : f32
    %cst_32 = arith.constant 1.000000e+00 : f32
    %33 = vector.broadcast %cst_31 : f32 to vector<8x384xf32>
    %34 = arith.maximumf %33, %32 : vector<8x384xf32>
    %35 = vector.broadcast %cst_32 : f32 to vector<8x384xf32>
    %36 = arith.minimumf %35, %34 : vector<8x384xf32>
    %c0_33 = arith.constant 0 : index
    %c0_34 = arith.constant 0 : index
    %c0_35 = arith.constant 0 : index
    %37 = vector.load %arg5[%c0_33, %c0_34, %c0_35] : memref<1x8x384xf32, #tpu.memory_space<vmem>>, vector<1x8x384xf32>
    %38 = vector.shape_cast %37 : vector<1x8x384xf32> to vector<8x384xf32>
    %39 = vector.shape_cast %36 : vector<8x384xf32> to vector<1x8x384xf32>
    tpu.vector_store %arg5[%c0_33, %c0_34, %c0_35], %39 {strides = array<i32>} : memref<1x8x384xf32, #tpu.memory_space<vmem>>, vector<1x8x384xf32>,
    return
  }
  func.func @transform_0(%arg0: i32, %arg1: i32) -> (i32, i32, i32, i32) {
    %c0_i32 = arith.constant 0 : i32
    %c0_i32_0 = arith.constant 0 : i32
    %c0_i32_1 = arith.constant 0 : i32
    return %arg0, %arg1, %c0_i32, %c0_i32_0 : i32, i32, i32, i32
  }
  func.func @transform_1(%arg0: i32, %arg1: i32) -> (i32, i32) {
    %c0_i32 = arith.constant 0 : i32
    %c0_i32_0 = arith.constant 0 : i32
    %c0_i32_1 = arith.constant 0 : i32
    return %c0_i32, %c0_i32_0 : i32, i32
  }
  func.func @transform_2(%arg0: i32, %arg1: i32) -> (i32, i32) {
    %c0_i32 = arith.constant 0 : i32
    %c0_i32_0 = arith.constant 0 : i32
    %c0_i32_1 = arith.constant 0 : i32
    return %c0_i32, %c0_i32_0 : i32, i32
  }
  func.func @transform_3(%arg0: i32, %arg1: i32) -> (i32, i32, i32) {
    %c0_i32 = arith.constant 0 : i32
    %c0_i32_0 = arith.constant 0 : i32
    return %arg0, %c0_i32, %arg1 : i32, i32, i32
  }
}

</mosaic_0001>

<llo_original>
// kernel: conffusion_forward.1
$region0: #{conffusion_forward.1}
  #allocation0 [shape = 'u32[]', space=smem, size = 0x4, offset = 0x4, fixed_abs, tag = 'smem constant byte address 0x4 - core index']
  #allocation1 [shape = 'u32[144,128]{1,0:T(1,128)}', space=vmem, size = 0x12000, scoped, tag = 'internal scratch']
  %s0 = inlined_call_operand.vmem [shape: bf16[2,1,8,512], index: 0, kind: input, shape index: {}]
  %s1 = inlined_call_operand.vmem [shape: f32[8,72], index: 1, kind: input, shape index: {}]
  %s2 = inlined_call_operand.vmem [shape: f32[8,1], index: 2, kind: input, shape index: {}]
  %s3 = inlined_call_operand.vmem [shape: f32[2,8,384], index: 3, kind: output, shape index: {}]
  %s4 = sld [smem:[#allocation0]]
  $region45: #{conffusion_forward.1} parent=0
    _
  %s6 = ssub.s32 1, %s4
  %s7 = scalar_select 0, %s6, %s4
  loop: start=0, step=1, limit=4
  $region2: #{conffusion_forward.1} parent=0 // loop_pre_header
    _
  $region3: #{conffusion_forward.1} parent=0 // loop_header
    %s9 = sphi 0, %s13
    %p10 = scmp.ge.s32.totalorder %s9, 4
    %s16 = sphi 0, %s28
    %s17 = sphi 0, %s24
    %s18 = sphi 0, %s16
    %s19 = sphi 0, %s17
    %s20 = sphi 0, %s18
    %s21 = sphi 0, %s19
    %s33 = sphi 0, %s35
    %s36 = sphi 0, %s33
    %s37 = sphi 0, %s36
    %s53 = sphi 0, %s37
    %s57 = sphi 0, %s57
    %s59 = sphi 0, %s57
    %s60 = sphi 0, %s59
    %s74 = sphi 0, %s60
    %s78 = sphi 0, %s78
    %s80 = sphi 0, %s78
    %s81 = sphi 0, %s80
    %s95 = sphi 0, %s81
    %s103 = sphi 0, %s105
    %s106 = sphi 0, %s103
    %s107 = sphi 0, %s106
    %s123 = sphi 0, %s107
  $region4: #{conffusion_forward.1} parent=0 // loop_header_branch
    %12 = sbr.rel (%p10) target = $region8
  $region5: #{conffusion_forward.1} parent=0 // loop_body
    %s14 = ssub.s32 %s9, 1
    %s15 = ssub.s32 %s9, 2
    %s22 = sadd.s32 1, %s17
    %p23 = scmp.ge.s32.totalorder %s22, 1
    %s24 = scalar_select %p23, 0, %s22
    %s25 = sadd.s32 1, %s16
    %s26 = scalar_select %p23, %s25, %s16
    %p27 = scmp.ge.s32.totalorder %s26, 2
    %s28 = scalar_select %p27, 0, %s26
    %s29 = ssub.s32 %s16, %s28
    %s30 = ssub.s32 %s17, %s24
    %s31 = sor.u32 %s29, %s30
    %p32 = scmp.eq.s32.totalorder %s31, 0
    %s34 = sadd.s32 %s33, 1
    %s35 = scalar_select %p32, %s33, %s34
    %p38 = pneg %p32
    %p39 = scmp.eq.s32.totalorder %s9, 1
    %p40 = por %p38, %p39
    %p41 = scmp.ne.s32.totalorder %s33, %s36
    %p42 = scmp.eq.s32.totalorder %s9, 0
    %p43 = por %p41, %p42
    %p44 = scmp.ne.s32.totalorder %s33, %s36
    %p45 = scmp.eq.s32.totalorder %s14, 1
    %p46 = por %p44, %p45
    %p47 = scmp.ne.s32.totalorder %s36, %s37
    %p48 = scmp.eq.s32.totalorder %s14, 0
    %p49 = por %p47, %p48
    %p50 = scmp.ne.s32.totalorder %s36, %s37
    %p51 = scmp.eq.s32.totalorder %s15, 1
    %p52 = por %p50, %p51
    %p54 = scmp.ne.s32.totalorder %s37, %s53
    %p55 = scmp.eq.s32.totalorder %s15, 0
    %p56 = por %p54, %p55
    %s58 = sadd.s32 %s57, 1
    %p61 = scmp.eq.s32.totalorder %s9, 1
    %p62 = scmp.ne.s32.totalorder %s57, %s59
    %p63 = scmp.eq.s32.totalorder %s9, 0
    %p64 = por %p62, %p63
    %p65 = scmp.ne.s32.totalorder %s57, %s59
    %p66 = scmp.eq.s32.totalorder %s14, 1
    %p67 = por %p65, %p66
    %p68 = scmp.ne.s32.totalorder %s59, %s60
    %p69 = scmp.eq.s32.totalorder %s14, 0
    %p70 = por %p68, %p69
    %p71 = scmp.ne.s32.totalorder %s59, %s60
    %p72 = scmp.eq.s32.totalorder %s15, 1
    %p73 = por %p71, %p72
    %p75 = scmp.ne.s32.totalorder %s60, %s74
    %p76 = scmp.eq.s32.totalorder %s15, 0
    %p77 = por %p75, %p76
    %s79 = sadd.s32 %s78, 1
    %p82 = scmp.eq.s32.totalorder %s9, 1
    %p83 = scmp.ne.s32.totalorder %s78, %s80
    %p84 = scmp.eq.s32.totalorder %s9, 0
    %p85 = por %p83, %p84
    %p86 = scmp.ne.s32.totalorder %s78, %s80
    %p87 = scmp.eq.s32.totalorder %s14, 1
    %p88 = por %p86, %p87
    %p89 = scmp.ne.s32.totalorder %s80, %s81
    %p90 = scmp.eq.s32.totalorder %s14, 0
    %p91 = por %p89, %p90
    %p92 = scmp.ne.s32.totalorder %s80, %s81
    %p93 = scmp.eq.s32.totalorder %s15, 1
    %p94 = por %p92, %p93
    %p96 = scmp.ne.s32.totalorder %s81, %s95
    %p97 = scmp.eq.s32.totalorder %s15, 0
    %p98 = por %p96, %p97
    %s99 = ssub.s32 %s16, %s28
    %s100 = ssub.s32 %s17, %s24
    %s101 = sor.u32 %s99, %s100
    %p102 = scmp.eq.s32.totalorder %s101, 0
    %s104 = sadd.s32 %s103, 1
    %s105 = scalar_select %p102, %s103, %s104
    %p108 = pneg %p102
    %p109 = scmp.eq.s32.totalorder %s9, 1
    %p110 = por %p108, %p109
    %p111 = scmp.ne.s32.totalorder %s103, %s106
    %p112 = scmp.eq.s32.totalorder %s9, 0
    %p113 = por %p111, %p112
    %p114 = scmp.ne.s32.totalorder %s103, %s106
    %p115 = scmp.eq.s32.totalorder %s14, 1
    %p116 = por %p114, %p115
    %p117 = scmp.ne.s32.totalorder %s106, %s107
    %p118 = scmp.eq.s32.totalorder %s14, 0
    %p119 = por %p117, %p118
    %p120 = scmp.ne.s32.totalorder %s106, %s107
    %p121 = scmp.eq.s32.totalorder %s15, 1
    %p122 = por %p120, %p121
    %p124 = scmp.ne.s32.totalorder %s107, %s123
    %p125 = scmp.eq.s32.totalorder %s15, 0
    %p126 = por %p124, %p125
    %p127 = scmp.le.s32.totalorder 1, %s9
    %p128 = scmp.lt.s32.totalorder %s9, 3
    %p129 = pnand %p127, %p128
    %p130 = pneg %p129
    // Predicated region
    $region9: #{conffusion_forward.1} parent=5 // pred_check
      _
    $region10: #{conffusion_forward.1} parent=5 // pred_check_branch
      %132 = sbr.rel (%p129) target = $region12
    $region11: #{conffusion_forward.1} parent=5 // pred_region
      %s133 = ssub.s32 %s9, 1
      // Predicated region
      $region13: #{conffusion_forward.1} parent=11 // pred_check
        %p134 = pneg %p70
      $region14: #{conffusion_forward.1} parent=11 // pred_check_branch
        %136 = sbr.rel (%p134) target = $region16
      $region15: #{conffusion_forward.1} parent=11 // pred_region
        _
      $region16: #{conffusion_forward.1} parent=11 // pred_fallthru
        _
      // Predicated region
      $region17: #{conffusion_forward.1} parent=11 // pred_check
        %p137 = pneg %p91
      $region18: #{conffusion_forward.1} parent=11 // pred_check_branch
        %139 = sbr.rel (%p137) target = $region20
      $region19: #{conffusion_forward.1} parent=11 // pred_region
        _
      $region20: #{conffusion_forward.1} parent=11 // pred_fallthru
        _
    $region12: #{conffusion_forward.1} parent=5 // pred_fallthru
      _
    %p140 = scmp.lt.s32.totalorder %s9, 2
    // Predicated region
    $region21: #{conffusion_forward.1} parent=5 // pred_check
      %p141 = pneg %p140
    $region22: #{conffusion_forward.1} parent=5 // pred_check_branch
      %143 = sbr.rel (%p141) target = $region24
    $region23: #{conffusion_forward.1} parent=5 // pred_region
      // Predicated region
      $region25: #{conffusion_forward.1} parent=23 // pred_check
        %p144 = pneg %p43
      $region26: #{conffusion_forward.1} parent=23 // pred_check_branch
        %146 = sbr.rel (%p144) target = $region28
      $region27: #{conffusion_forward.1} parent=23 // pred_region
        %p147 = scmp.lt.s32.totalorder %s16, 1
        %s148 = scalar_select %p147, %s16, 1
        %p149 = scmp.lt.s32.totalorder %s17, 0
        %s150 = scalar_select %p149, %s17, 0
        %s151 = smul.addr %s150, 4
        %s152 = smul.addr %s148, 4
        %s153 = sadd.s32 %s151, %s152
        %s154 = smul.addr %s153, 4
        %s155 = scalar_lea.vmem %s0, %s154
      $region28: #{conffusion_forward.1} parent=23 // pred_fallthru
        _
    $region24: #{conffusion_forward.1} parent=5 // pred_fallthru
      _
    %p156 = scmp.le.s32.totalorder 1, %s9
    %p157 = scmp.lt.s32.totalorder %s9, 3
    %p158 = pnand %p156, %p157
    %p159 = pneg %p158
    // Predicated region
    $region29: #{conffusion_forward.1} parent=5 // pred_check
      _
    $region30: #{conffusion_forward.1} parent=5 // pred_check_branch
      %161 = sbr.rel (%p158) target = $region32
    $region31: #{conffusion_forward.1} parent=5 // pred_region
      %s162 = ssub.s32 %s9, 1
      %p163 = scmp.lt.s32.totalorder %s18, 1
      %s164 = scalar_select %p163, %s18, 1
      %p165 = scmp.lt.s32.totalorder %s19, 0
      %s166 = scalar_select %p165, %s19, 0
      %s167 = smul.addr %s166, 4
      %s168 = smul.addr %s164, 4
      %s169 = sadd.s32 %s167, %s168
      %s170 = smul.addr %s169, 4
      %s171 = scalar_lea.vmem %s0, %s170
      %p172 = pneg %p49
      %p173 = pneg %p46
      %p174 = pneg %p70
      %p175 = pneg %p67
      %p176 = pneg %p91
      %p177 = pneg %p88
      %p178 = pneg %p119
      %p179 = pneg %p116
      %s180 = smul.u32 3, %s19
      %p181 = scmp.lt.s32.totalorder %s18, 1
      %s182 = scalar_select %p181, %s18, 1
      %p183 = scmp.lt.s32.totalorder %s180, 2
      %s184 = scalar_select %p183, %s180, 2
      %s185 = smul.addr %s182, 3
      %s186 = sadd.s32 %s184, %s185
      %s187 = smul.addr %s186, 8
      %s188 = scalar_lea.vmem %s3, %s187
      %p189 = scmp.lt.s32.totalorder %s18, 1
      %s190 = scalar_select %p189, %s18, 1
      %p191 = scmp.lt.s32.totalorder %s19, 0
      %s192 = scalar_select %p191, %s19, 0
      %s193 = smul.addr %s192, 4
      %s194 = smul.addr %s190, 4
      %s195 = sadd.s32 %s193, %s194
      %s196 = smul.addr %s195, 4
      %s197 = scalar_lea.vmem %s0, %s196
      %s198 = smul.u32 3, %s19
      %p199 = scmp.lt.s32.totalorder %s18, 1
      %s200 = scalar_select %p199, %s18, 1
      %p201 = scmp.lt.s32.totalorder %s198, 2
      %s202 = scalar_select %p201, %s198, 2
      %s203 = smul.addr %s200, 3
      %s204 = sadd.s32 %s202, %s203
      %s205 = smul.addr %s204, 8
      %s206 = scalar_lea.vmem %s3, %s205
      %s207 = smul.u32 3, %s19
      %v208 = vld [vmem:[%s197] sm:$0xff]
      %v209 = vld [vmem:[%s197 + $0x8] sm:$0xf]
      %v210 = vunpack.c.l.bf16 %v208
      %v211 = vunpack.c.h.bf16 %v208
      %v212 = vunpack.c.l.bf16 %v209
      %v213 = vld [vmem:[%s197] sm:$0xff]
      %v214 = vld [vmem:[%s197 + $0x8] sm:$0xff]
      %v215 = vunpack.c.l.bf16 %v213
      %v216 = vunpack.c.h.bf16 %v213
      %v217 = vunpack.c.l.bf16 %v214
      %v218 = vunpack.c.h.bf16 %v214
      %223 = vrot.lane.b32.xlu0 %v215, 127
      %v224 = vpop.permute.xlu0 %223
      %225 = vrot.lane.b32.xlu0 %v216, 127
      %v226 = vpop.permute.xlu0 %225
      %227 = vrot.lane.b32.xlu0 %v217, 127
      %v228 = vpop.permute.xlu0 %227
      %229 = vrot.lane.b32.xlu0 %v218, 127
      %v230 = vpop.permute.xlu0 %229
      %vm231 = vcmask 1039360
      %v232 = vsel %vm231, %v224, %v226
      %v233 = vsel %vm231, %v226, %v228
      %v234 = vsel %vm231, %v228, %v230
      %238 = vrot.lane.b32.xlu0 %v215, 126
      %v239 = vpop.permute.xlu0 %238
      %240 = vrot.lane.b32.xlu0 %v216, 126
      %v241 = vpop.permute.xlu0 %240
      %242 = vrot.lane.b32.xlu0 %v217, 126
      %v243 = vpop.permute.xlu0 %242
      %244 = vrot.lane.b32.xlu0 %v218, 126
      %v245 = vpop.permute.xlu0 %244
      %vm246 = vcmask 1031168
      %v247 = vsel %vm246, %v239, %v241
      %v248 = vsel %vm246, %v241, %v243
      %v249 = vsel %vm246, %v243, %v245
      %253 = vrot.lane.b32.xlu0 %v215, 110
      %v254 = vpop.permute.xlu0 %253
      %255 = vrot.lane.b32.xlu0 %v216, 110
      %v256 = vpop.permute.xlu0 %255
      %257 = vrot.lane.b32.xlu0 %v217, 110
      %v258 = vpop.permute.xlu0 %257
      %259 = vrot.lane.b32.xlu0 %v218, 110
      %v260 = vpop.permute.xlu0 %259
      %vm261 = vcmask 900096
      %v262 = vsel %vm261, %v254, %v256
      %v263 = vsel %vm261, %v256, %v258
      %v264 = vsel %vm261, %v258, %v260
      %268 = vrot.lane.b32.xlu0 %v215, 109
      %v269 = vpop.permute.xlu0 %268
      %270 = vrot.lane.b32.xlu0 %v216, 109
      %v271 = vpop.permute.xlu0 %270
      %272 = vrot.lane.b32.xlu0 %v217, 109
      %v273 = vpop.permute.xlu0 %272
      %274 = vrot.lane.b32.xlu0 %v218, 109
      %v275 = vpop.permute.xlu0 %274
      %vm276 = vcmask 891904
      %v277 = vsel %vm276, %v269, %v271
      %v278 = vsel %vm276, %v271, %v273
      %v279 = vsel %vm276, %v273, %v275
      %283 = vrot.lane.b32.xlu0 %v215, 108
      %v284 = vpop.permute.xlu0 %283
      %285 = vrot.lane.b32.xlu0 %v216, 108
      %v286 = vpop.permute.xlu0 %285
      %287 = vrot.lane.b32.xlu0 %v217, 108
      %v288 = vpop.permute.xlu0 %287
      %289 = vrot.lane.b32.xlu0 %v218, 108
      %v290 = vpop.permute.xlu0 %289
      %vm291 = vcmask 883712
      %v292 = vsel %vm291, %v284, %v286
      %v293 = vsel %vm291, %v286, %v288
      %v294 = vsel %vm291, %v288, %v290
      %298 = vrot.lane.b32.xlu0 %v215, 92
      %v299 = vpop.permute.xlu0 %298
      %300 = vrot.lane.b32.xlu0 %v216, 92
      %v301 = vpop.permute.xlu0 %300
      %302 = vrot.lane.b32.xlu0 %v217, 92
      %v303 = vpop.permute.xlu0 %302
      %304 = vrot.lane.b32.xlu0 %v218, 92
      %v305 = vpop.permute.xlu0 %304
      %vm306 = vcmask 752640
      %v307 = vsel %vm306, %v299, %v301
      %v308 = vsel %vm306, %v301, %v303
      %v309 = vsel %vm306, %v303, %v305
      %313 = vrot.lane.b32.xlu0 %v215, 91
      %v314 = vpop.permute.xlu0 %313
      %315 = vrot.lane.b32.xlu0 %v216, 91
      %v316 = vpop.permute.xlu0 %315
      %317 = vrot.lane.b32.xlu0 %v217, 91
      %v318 = vpop.permute.xlu0 %317
      %319 = vrot.lane.b32.xlu0 %v218, 91
      %v320 = vpop.permute.xlu0 %319
      %vm321 = vcmask 744448
      %v322 = vsel %vm321, %v314, %v316
      %v323 = vsel %vm321, %v316, %v318
      %v324 = vsel %vm321, %v318, %v320
      %328 = vrot.lane.b32.xlu0 %v215, 90
      %v329 = vpop.permute.xlu0 %328
      %330 = vrot.lane.b32.xlu0 %v216, 90
      %v331 = vpop.permute.xlu0 %330
      %332 = vrot.lane.b32.xlu0 %v217, 90
      %v333 = vpop.permute.xlu0 %332
      %334 = vrot.lane.b32.xlu0 %v218, 90
      %v335 = vpop.permute.xlu0 %334
      %vm336 = vcmask 736256
      %v337 = vsel %vm336, %v329, %v331
      %v338 = vsel %vm336, %v331, %v333
      %v339 = vsel %vm336, %v333, %v335
      %v343 = vld [vmem:[%s1] sm:$0xff]
      %v344 = vld [vmem:[%s2] sm:$0xff]
      %346 = vset.pattern.permute.xlu0 0
      %347 = vperm.xlu0 %346, %v344
      %v348 = vpop.permute.xlu0 %347
      %vm350 = vcmask 588800
      %v352 = vsel %vm350, %v343, 0
      %354 = vmatprep.subr.mxu0 0.0
      %355 = vmatpush1.msra.mxu0 0.0
      %356 = vmatprep.subr.mxu0 0.0
      %357 = vmatpush1.msra.mxu0 0.0
      %358 = vmatprep.subr.mxu0 0.0
      %359 = vmatpush1.msra.mxu0 0.0
      %360 = vmatprep.subr.mxu0 0.0
      %361 = vmatpush1.msra.mxu0 0.0
      %362 = vmatprep.subr.mxu0 0.0
      %363 = vmatpush1.msra.mxu0 0.0
      %364 = vmatprep.subr.mxu0 0.0
      %365 = vmatpush1.msra.mxu0 0.0
      %366 = vmatprep.subr.mxu0 0.0
      %367 = vmatpush1.msra.mxu0 0.0
      %v368 = vand.u32 %v338, 4294901760
      %369 = vmatprep.subr.mxu0 %v368
      %v370 = vand.u32 %v337, 4294901760
      %371 = vmatpush1.msra.mxu0 %v370
      %v372 = vand.u32 %v323, 4294901760
      %373 = vmatprep.subr.mxu0 %v372
      %v374 = vand.u32 %v322, 4294901760
      %375 = vmatpush1.msra.mxu0 %v374
      %v376 = vand.u32 %v308, 4294901760
      %377 = vmatprep.subr.mxu0 %v376
      %v378 = vand.u32 %v307, 4294901760
      %379 = vmatpush1.msra.mxu0 %v378
      %v380 = vand.u32 %v293, 4294901760
      %381 = vmatprep.subr.mxu0 %v380
      %v382 = vand.u32 %v292, 4294901760
      %383 = vmatpush1.msra.mxu0 %v382
      %v384 = vand.u32 %v278, 4294901760
      %385 = vmatprep.subr.mxu0 %v384
      %v386 = vand.u32 %v277, 4294901760
      %387 = vmatpush1.msra.mxu0 %v386
      %v388 = vand.u32 %v263, 4294901760
      %389 = vmatprep.subr.mxu0 %v388
      %v390 = vand.u32 %v262, 4294901760
      %391 = vmatpush1.msra.mxu0 %v390
      %v392 = vand.u32 %v248, 4294901760
      %393 = vmatprep.subr.mxu0 %v392
      %v394 = vand.u32 %v247, 4294901760
      %395 = vmatpush1.msra.mxu0 %v394
      %v396 = vand.u32 %v233, 4294901760
      %397 = vmatprep.subr.mxu0 %v396
      %v398 = vand.u32 %v232, 4294901760
      %399 = vmatpush1.msra.mxu0 %v398
      %400 = vmatprep.subr.mxu0 %v211
      %401 = vmatpush1.msra.mxu0 %v210
      %402 = vmatprep.subr.mxu0 0.0
      %403 = vmatpush2.msra.mxu0 0.0
      %404 = vmatprep.subr.mxu0 0.0
      %405 = vmatpush2.msra.mxu0 0.0
      %406 = vmatprep.subr.mxu0 0.0
      %407 = vmatpush2.msra.mxu0 0.0
      %408 = vmatprep.subr.mxu0 0.0
      %409 = vmatpush2.msra.mxu0 0.0
      %410 = vmatprep.subr.mxu0 0.0
      %411 = vmatpush2.msra.mxu0 0.0
      %412 = vmatprep.subr.mxu0 0.0
      %413 = vmatpush2.msra.mxu0 0.0
      %414 = vmatprep.subr.mxu0 0.0
      %415 = vmatpush2.msra.mxu0 0.0
      %416 = vmatprep.subr.mxu0 0.0
      %417 = vmatpush2.msra.mxu0 0.0
      %418 = vmatprep.subr.mxu0 0.0
      %419 = vmatpush2.msra.mxu0 0.0
      %420 = vmatprep.subr.mxu0 0.0
      %421 = vmatpush2.msra.mxu0 0.0
      %422 = vmatprep.subr.mxu0 0.0
      %423 = vmatpush2.msra.mxu0 0.0
      %424 = vmatprep.subr.mxu0 0.0
      %425 = vmatpush2.msra.mxu0 0.0
      %426 = vmatprep.subr.mxu0 0.0
      %427 = vmatpush2.msra.mxu0 0.0
      %428 = vmatprep.subr.mxu0 0.0
      %429 = vmatpush2.msra.mxu0 0.0
      %430 = vmatprep.subr.mxu0 0.0
      %431 = vmatpush2.msra.mxu0 0.0
      %432 = vmatprep.subr.mxu0 0.0
      %433 = vmatpush2.msra.mxu0 0.0
      %434 = vmatprep.mubr.f32.mxu0 0.0
      %v435 = vand.u32 %v352, 4294901760
      %v436 = vsub.f32 %v352, %v435
      %v437 = vand.u32 %v436, 4294901760
      %v438 = vsub.f32 %v436, %v437
      %v439 = vand.u32 %v438, 4294901760
      %440 = vmatmul.mubr.f32.gmra.mxu0 %v439
      %v441 = vpop.f32.mrf.mxu0
      %v442 = vadd.f32 %v348, %v441
      %v443 = vpop.f32.mrf.mxu0
      %v444 = vadd.f32 %v348, %v443
      %445 = vdwg.mxu0
      %446 = vmatprep.subr.mxu0 0.0
      %447 = vmatpush1.msra.mxu0 0.0
      %448 = vmatprep.subr.mxu0 0.0
      %449 = vmatpush1.msra.mxu0 0.0
      %450 = vmatprep.subr.mxu0 0.0
      %451 = vmatpush1.msra.mxu0 0.0
      %452 = vmatprep.subr.mxu0 0.0
      %453 = vmatpush1.msra.mxu0 0.0
      %454 = vmatprep.subr.mxu0 0.0
      %455 = vmatpush1.msra.mxu0 0.0
      %456 = vmatprep.subr.mxu0 0.0
      %457 = vmatpush1.msra.mxu0 0.0
      %458 = vmatprep.subr.mxu0 0.0
      %459 = vmatpush1.msra.mxu0 0.0
      %v460 = vand.u32 %v338, 4294901760
      %v461 = vsub.f32 %v338, %v460
      %v462 = vand.u32 %v461, 4294901760
      %v463 = vsub.f32 %v461, %v462
      %v464 = vand.u32 %v463, 4294901760
      %465 = vmatprep.subr.mxu0 %v464
      %v466 = vand.u32 %v337, 4294901760
      %v467 = vsub.f32 %v337, %v466
      %v468 = vand.u32 %v467, 4294901760
      %v469 = vsub.f32 %v467, %v468
      %v470 = vand.u32 %v469, 4294901760
      %471 = vmatpush1.msra.mxu0 %v470
      %v472 = vand.u32 %v323, 4294901760
      %v473 = vsub.f32 %v323, %v472
      %v474 = vand.u32 %v473, 4294901760
      %v475 = vsub.f32 %v473, %v474
      %v476 = vand.u32 %v475, 4294901760
      %477 = vmatprep.subr.mxu0 %v476
      %v478 = vand.u32 %v322, 4294901760
      %v479 = vsub.f32 %v322, %v478
      %v480 = vand.u32 %v479, 4294901760
      %v481 = vsub.f32 %v479, %v480
      %v482 = vand.u32 %v481, 4294901760
      %483 = vmatpush1.msra.mxu0 %v482
      %v484 = vand.u32 %v308, 4294901760
      %v485 = vsub.f32 %v308, %v484
      %v486 = vand.u32 %v485, 4294901760
      %v487 = vsub.f32 %v485, %v486
      %v488 = vand.u32 %v487, 4294901760
      %489 = vmatprep.subr.mxu0 %v488
      %v490 = vand.u32 %v307, 4294901760
      %v491 = vsub.f32 %v307, %v490
      %v492 = vand.u32 %v491, 4294901760
      %v493 = vsub.f32 %v491, %v492
      %v494 = vand.u32 %v493, 4294901760
      %495 = vmatpush1.msra.mxu0 %v494
      %v496 = vand.u32 %v293, 4294901760
      %v497 = vsub.f32 %v293, %v496
      %v498 = vand.u32 %v497, 4294901760
      %v499 = vsub.f32 %v497, %v498
      %v500 = vand.u32 %v499, 4294901760
      %501 = vmatprep.subr.mxu0 %v500
      %v502 = vand.u32 %v292, 4294901760
      %v503 = vsub.f32 %v292, %v502
      %v504 = vand.u32 %v503, 4294901760
      %v505 = vsub.f32 %v503, %v504
      %v506 = vand.u32 %v505, 4294901760
      %507 = vmatpush1.msra.mxu0 %v506
      %v508 = vand.u32 %v278, 4294901760
      %v509 = vsub.f32 %v278, %v508
      %v510 = vand.u32 %v509, 4294901760
      %v511 = vsub.f32 %v509, %v510
      %v512 = vand.u32 %v511, 4294901760
      %513 = vmatprep.subr.mxu0 %v512
      %v514 = vand.u32 %v277, 4294901760
      %v515 = vsub.f32 %v277, %v514
      %v516 = vand.u32 %v515, 4294901760
      %v517 = vsub.f32 %v515, %v516
      %v518 = vand.u32 %v517, 4294901760
      %519 = vmatpush1.msra.mxu0 %v518
      %v520 = vand.u32 %v263, 4294901760
      %v521 = vsub.f32 %v263, %v520
      %v522 = vand.u32 %v521, 4294901760
      %v523 = vsub.f32 %v521, %v522
      %v524 = vand.u32 %v523, 4294901760
      %525 = vmatprep.subr.mxu0 %v524
      %v526 = vand.u32 %v262, 4294901760
      %v527 = vsub.f32 %v262, %v526
      %v528 = vand.u32 %v527, 4294901760
      %v529 = vsub.f32 %v527, %v528
      %v530 = vand.u32 %v529, 4294901760
      %531 = vmatpush1.msra.mxu0 %v530
      %v532 = vand.u32 %v248, 4294901760
      %v533 = vsub.f32 %v248, %v532
      %v534 = vand.u32 %v533, 4294901760
      %v535 = vsub.f32 %v533, %v534
      %v536 = vand.u32 %v535, 4294901760
      %537 = vmatprep.subr.mxu0 %v536
      %v538 = vand.u32 %v247, 4294901760
      %v539 = vsub.f32 %v247, %v538
      %v540 = vand.u32 %v539, 4294901760
      %v541 = vsub.f32 %v539, %v540
      %v542 = vand.u32 %v541, 4294901760
      %543 = vmatpush1.msra.mxu0 %v542
      %v544 = vand.u32 %v233, 4294901760
      %v545 = vsub.f32 %v233, %v544
      %v546 = vand.u32 %v545, 4294901760
      %v547 = vsub.f32 %v545, %v546
      %v548 = vand.u32 %v547, 4294901760
      %549 = vmatprep.subr.mxu0 %v548
      %v550 = vand.u32 %v232, 4294901760
      %v551 = vsub.f32 %v232, %v550
      %v552 = vand.u32 %v551, 4294901760
      %v553 = vsub.f32 %v551, %v552
      %v554 = vand.u32 %v553, 4294901760
      %555 = vmatpush1.msra.mxu0 %v554
      %v556 = vsub.f32 %v211, %v211
      %v557 = vand.u32 %v556, 4294901760
      %v558 = vsub.f32 %v556, %v557
      %v559 = vand.u32 %v558, 4294901760
      %560 = vmatprep.subr.mxu0 %v559
      %v561 = vsub.f32 %v210, %v210
      %v562 = vand.u32 %v561, 4294901760
      %v563 = vsub.f32 %v561, %v562
      %v564 = vand.u32 %v563, 4294901760
      %565 = vmatpush1.msra.mxu0 %v564
      %566 = vmatprep.subr.mxu0 0.0
      %567 = vmatpush2.msra.mxu0 0.0
      %568 = vmatprep.subr.mxu0 0.0
      %569 = vmatpush2.msra.mxu0 0.0
      %570 = vmatprep.subr.mxu0 0.0
      %571 = vmatpush2.msra.mxu0 0.0
      %572 = vmatprep.subr.mxu0 0.0
      %573 = vmatpush2.msra.mxu0 0.0
      %574 = vmatprep.subr.mxu0 0.0
      %575 = vmatpush2.msra.mxu0 0.0
      %576 = vmatprep.subr.mxu0 0.0
      %577 = vmatpush2.msra.mxu0 0.0
      %578 = vmatprep.subr.mxu0 0.0
      %579 = vmatpush2.msra.mxu0 0.0
      %580 = vmatprep.subr.mxu0 0.0
      %581 = vmatpush2.msra.mxu0 0.0
      %582 = vmatprep.subr.mxu0 0.0
      %583 = vmatpush2.msra.mxu0 0.0
      %584 = vmatprep.subr.mxu0 0.0
      %585 = vmatpush2.msra.mxu0 0.0
      %586 = vmatprep.subr.mxu0 0.0
      %587 = vmatpush2.msra.mxu0 0.0
      %588 = vmatprep.subr.mxu0 0.0
      %589 = vmatpush2.msra.mxu0 0.0
      %590 = vmatprep.subr.mxu0 0.0
      %591 = vmatpush2.msra.mxu0 0.0
      %592 = vmatprep.subr.mxu0 0.0
      %593 = vmatpush2.msra.mxu0 0.0
      %594 = vmatprep.subr.mxu0 0.0
      %595 = vmatpush2.msra.mxu0 0.0
      %596 = vmatprep.subr.mxu0 0.0
      %597 = vmatpush2.msra.mxu0 0.0
      %598 = vmatprep.mubr.f32.mxu0 0.0
      %v599 = vand.u32 %v352, 4294901760
      %600 = vmatmul.mubr.f32.gmra.mxu0 %v599
      %v601 = vpop.f32.mrf.mxu0
      %v602 = vadd.f32 %v442, %v601
      %v603 = vpop.f32.mrf.mxu0
      %v604 = vadd.f32 %v444, %v603
      %605 = vdwg.mxu0
      %606 = vmatprep.subr.mxu0 0.0
      %607 = vmatpush1.msra.mxu0 0.0
      %608 = vmatprep.subr.mxu0 0.0
      %609 = vmatpush1.msra.mxu0 0.0
      %610 = vmatprep.subr.mxu0 0.0
      %611 = vmatpush1.msra.mxu0 0.0
      %612 = vmatprep.subr.mxu0 0.0
      %613 = vmatpush1.msra.mxu0 0.0
      %614 = vmatprep.subr.mxu0 0.0
      %615 = vmatpush1.msra.mxu0 0.0
      %616 = vmatprep.subr.mxu0 0.0
      %617 = vmatpush1.msra.mxu0 0.0
      %618 = vmatprep.subr.mxu0 0.0
      %619 = vmatpush1.msra.mxu0 0.0
      %v620 = vand.u32 %v338, 4294901760
      %v621 = vsub.f32 %v338, %v620
      %622 = vmatprep.subr.mxu0 %v621
      %v623 = vand.u32 %v337, 4294901760
      %v624 = vsub.f32 %v337, %v623
      %625 = vmatpush1.msra.mxu0 %v624
      %v626 = vand.u32 %v323, 4294901760
      %v627 = vsub.f32 %v323, %v626
      %628 = vmatprep.subr.mxu0 %v627
      %v629 = vand.u32 %v322, 4294901760
      %v630 = vsub.f32 %v322, %v629
      %631 = vmatpush1.msra.mxu0 %v630
      %v632 = vand.u32 %v308, 4294901760
      %v633 = vsub.f32 %v308, %v632
      %634 = vmatprep.subr.mxu0 %v633
      %v635 = vand.u32 %v307, 4294901760
      %v636 = vsub.f32 %v307, %v635
      %637 = vmatpush1.msra.mxu0 %v636
      %v638 = vand.u32 %v293, 4294901760
      %v639 = vsub.f32 %v293, %v638
      %640 = vmatprep.subr.mxu0 %v639
      %v641 = vand.u32 %v292, 4294901760
      %v642 = vsub.f32 %v292, %v641
      %643 = vmatpush1.msra.mxu0 %v642
      %v644 = vand.u32 %v278, 4294901760
      %v645 = vsub.f32 %v278, %v644
      %646 = vmatprep.subr.mxu0 %v645
      %v647 = vand.u32 %v277, 4294901760
      %v648 = vsub.f32 %v277, %v647
      %649 = vmatpush1.msra.mxu0 %v648
      %v650 = vand.u32 %v263, 4294901760
      %v651 = vsub.f32 %v263, %v650
      %652 = vmatprep.subr.mxu0 %v651
      %v653 = vand.u32 %v262, 4294901760
      %v654 = vsub.f32 %v262, %v653
      %655 = vmatpush1.msra.mxu0 %v654
      %v656 = vand.u32 %v248, 4294901760
      %v657 = vsub.f32 %v248, %v656
      %658 = vmatprep.subr.mxu0 %v657
      %v659 = vand.u32 %v247, 4294901760
      %v660 = vsub.f32 %v247, %v659
      %661 = vmatpush1.msra.mxu0 %v660
      %v662 = vand.u32 %v233, 4294901760
      %v663 = vsub.f32 %v233, %v662
      %664 = vmatprep.subr.mxu0 %v663
      %v665 = vand.u32 %v232, 4294901760
      %v666 = vsub.f32 %v232, %v665
      %667 = vmatpush1.msra.mxu0 %v666
      %v668 = vsub.f32 %v211, %v211
      %669 = vmatprep.subr.mxu0 %v668
      %v670 = vsub.f32 %v210, %v210
      %671 = vmatpush1.msra.mxu0 %v670
      %672 = vmatprep.subr.mxu0 0.0
      %673 = vmatpush2.msra.mxu0 0.0
      %674 = vmatprep.subr.mxu0 0.0
      %675 = vmatpush2.msra.mxu0 0.0
      %676 = vmatprep.subr.mxu0 0.0
      %677 = vmatpush2.msra.mxu0 0.0
      %678 = vmatprep.subr.mxu0 0.0
      %679 = vmatpush2.msra.mxu0 0.0
      %680 = vmatprep.subr.mxu0 0.0
      %681 = vmatpush2.msra.mxu0 0.0
      %682 = vmatprep.subr.mxu0 0.0
      %683 = vmatpush2.msra.mxu0 0.0
      %684 = vmatprep.subr.mxu0 0.0
      %685 = vmatpush2.msra.mxu0 0.0
      %686 = vmatprep.subr.mxu0 0.0
      %687 = vmatpush2.msra.mxu0 0.0
      %688 = vmatprep.subr.mxu0 0.0
      %689 = vmatpush2.msra.mxu0 0.0
      %690 = vmatprep.subr.mxu0 0.0
      %691 = vmatpush2.msra.mxu0 0.0
      %692 = vmatprep.subr.mxu0 0.0
      %693 = vmatpush2.msra.mxu0 0.0
      %694 = vmatprep.subr.mxu0 0.0
      %695 = vmatpush2.msra.mxu0 0.0
      %696 = vmatprep.subr.mxu0 0.0
      %697 = vmatpush2.msra.mxu0 0.0
      %698 = vmatprep.subr.mxu0 0.0
      %699 = vmatpush2.msra.mxu0 0.0
      %700 = vmatprep.subr.mxu0 0.0
      %701 = vmatpush2.msra.mxu0 0.0
      %702 = vmatprep.subr.mxu0 0.0
      %703 = vmatpush2.msra.mxu0 0.0
      %704 = vmatprep.mubr.f32.mxu0 0.0
      %v705 = vand.u32 %v352, 4294901760
      %v706 = vsub.f32 %v352, %v705
      %707 = vmatmul.mubr.f32.gmra.mxu0 %v706
      %v708 = vpop.f32.mrf.mxu0
      %v709 = vadd.f32 %v602, %v708
      %v710 = vpop.f32.mrf.mxu0
      %v711 = vadd.f32 %v604, %v710
      %712 = vdwg.mxu0
      %713 = vmatprep.subr.mxu0 0.0
      %714 = vmatpush1.msra.mxu0 0.0
      %715 = vmatprep.subr.mxu0 0.0
      %716 = vmatpush1.msra.mxu0 0.0
      %717 = vmatprep.subr.mxu0 0.0
      %718 = vmatpush1.msra.mxu0 0.0
      %719 = vmatprep.subr.mxu0 0.0
      %720 = vmatpush1.msra.mxu0 0.0
      %721 = vmatprep.subr.mxu0 0.0
      %722 = vmatpush1.msra.mxu0 0.0
      %723 = vmatprep.subr.mxu0 0.0
      %724 = vmatpush1.msra.mxu0 0.0
      %725 = vmatprep.subr.mxu0 0.0
      %726 = vmatpush1.msra.mxu0 0.0
      %v727 = vand.u32 %v338, 4294901760
      %728 = vmatprep.subr.mxu0 %v727
      %v729 = vand.u32 %v337, 4294901760
      %730 = vmatpush1.msra.mxu0 %v729
      %v731 = vand.u32 %v323, 4294901760
      %732 = vmatprep.subr.mxu0 %v731
      %v733 = vand.u32 %v322, 4294901760
      %734 = vmatpush1.msra.mxu0 %v733
      %v735 = vand.u32 %v308, 4294901760
      %736 = vmatprep.subr.mxu0 %v735
      %v737 = vand.u32 %v307, 4294901760
      %738 = vmatpush1.msra.mxu0 %v737
      %v739 = vand.u32 %v293, 4294901760
      %740 = vmatprep.subr.mxu0 %v739
      %v741 = vand.u32 %v292, 4294901760
      %742 = vmatpush1.msra.mxu0 %v741
      %v743 = vand.u32 %v278, 4294901760
      %744 = vmatprep.subr.mxu0 %v743
      %v745 = vand.u32 %v277, 4294901760
      %746 = vmatpush1.msra.mxu0 %v745
      %v747 = vand.u32 %v263, 4294901760
      %748 = vmatprep.subr.mxu0 %v747
      %v749 = vand.u32 %v262, 4294901760
      %750 = vmatpush1.msra.mxu0 %v749
      %v751 = vand.u32 %v248, 4294901760
      %752 = vmatprep.subr.mxu0 %v751
      %v753 = vand.u32 %v247, 4294901760
      %754 = vmatpush1.msra.mxu0 %v753
      %v755 = vand.u32 %v233, 4294901760
      %756 = vmatprep.subr.mxu0 %v755
      %v757 = vand.u32 %v232, 4294901760
      %758 = vmatpush1.msra.mxu0 %v757
      %759 = vmatprep.subr.mxu0 %v211
      %760 = vmatpush1.msra.mxu0 %v210
      %761 = vmatprep.subr.mxu0 0.0
      %762 = vmatpush2.msra.mxu0 0.0
      %763 = vmatprep.subr.mxu0 0.0
      %764 = vmatpush2.msra.mxu0 0.0
      %765 = vmatprep.subr.mxu0 0.0
      %766 = vmatpush2.msra.mxu0 0.0
      %767 = vmatprep.subr.mxu0 0.0
      %768 = vmatpush2.msra.mxu0 0.0
      %769 = vmatprep.subr.mxu0 0.0
      %770 = vmatpush2.msra.mxu0 0.0
      %771 = vmatprep.subr.mxu0 0.0
      %772 = vmatpush2.msra.mxu0 0.0
      %773 = vmatprep.subr.mxu0 0.0
      %774 = vmatpush2.msra.mxu0 0.0
      %775 = vmatprep.subr.mxu0 0.0
      %776 = vmatpush2.msra.mxu0 0.0
      %777 = vmatprep.subr.mxu0 0.0
      %778 = vmatpush2.msra.mxu0 0.0
      %779 = vmatprep.subr.mxu0 0.0
      %780 = vmatpush2.msra.mxu0 0.0
      %781 = vmatprep.subr.mxu0 0.0
      %782 = vmatpush2.msra.mxu0 0.0
      %783 = vmatprep.subr.mxu0 0.0
      %784 = vmatpush2.msra.mxu0 0.0
      %785 = vmatprep.subr.mxu0 0.0
      %786 = vmatpush2.msra.mxu0 0.0
      %787 = vmatprep.subr.mxu0 0.0
      %788 = vmatpush2.msra.mxu0 0.0
      %789 = vmatprep.subr.mxu0 0.0
      %790 = vmatpush2.msra.mxu0 0.0
      %791 = vmatprep.subr.mxu0 0.0
      %792 = vmatpush2.msra.mxu0 0.0
      %793 = vmatprep.mubr.f32.mxu0 0.0
      %v794 = vand.u32 %v352, 4294901760
      %v795 = vsub.f32 %v352, %v794
      %v796 = vand.u32 %v795, 4294901760
      %797 = vmatmul.mubr.f32.gmra.mxu0 %v796
      %v798 = vpop.f32.mrf.mxu0
      %v799 = vadd.f32 %v709, %v798
      %v800 = vpop.f32.mrf.mxu0
      %v801 = vadd.f32 %v711, %v800
      %802 = vdwg.mxu0
      %803 = vmatprep.subr.mxu0 0.0
      %804 = vmatpush1.msra.mxu0 0.0
      %805 = vmatprep.subr.mxu0 0.0
      %806 = vmatpush1.msra.mxu0 0.0
      %807 = vmatprep.subr.mxu0 0.0
      %808 = vmatpush1.msra.mxu0 0.0
      %809 = vmatprep.subr.mxu0 0.0
      %810 = vmatpush1.msra.mxu0 0.0
      %811 = vmatprep.subr.mxu0 0.0
      %812 = vmatpush1.msra.mxu0 0.0
      %813 = vmatprep.subr.mxu0 0.0
      %814 = vmatpush1.msra.mxu0 0.0
      %815 = vmatprep.subr.mxu0 0.0
      %816 = vmatpush1.msra.mxu0 0.0
      %v817 = vand.u32 %v338, 4294901760
      %v818 = vsub.f32 %v338, %v817
      %v819 = vand.u32 %v818, 4294901760
      %820 = vmatprep.subr.mxu0 %v819
      %v821 = vand.u32 %v337, 4294901760
      %v822 = vsub.f32 %v337, %v821
      %v823 = vand.u32 %v822, 4294901760
      %824 = vmatpush1.msra.mxu0 %v823
      %v825 = vand.u32 %v323, 4294901760
      %v826 = vsub.f32 %v323, %v825
      %v827 = vand.u32 %v826, 4294901760
      %828 = vmatprep.subr.mxu0 %v827
      %v829 = vand.u32 %v322, 4294901760
      %v830 = vsub.f32 %v322, %v829
      %v831 = vand.u32 %v830, 4294901760
      %832 = vmatpush1.msra.mxu0 %v831
      %v833 = vand.u32 %v308, 4294901760
      %v834 = vsub.f32 %v308, %v833
      %v835 = vand.u32 %v834, 4294901760
      %836 = vmatprep.subr.mxu0 %v835
      %v837 = vand.u32 %v307, 4294901760
      %v838 = vsub.f32 %v307, %v837
      %v839 = vand.u32 %v838, 4294901760
      %840 = vmatpush1.msra.mxu0 %v839
      %v841 = vand.u32 %v293, 4294901760
      %v842 = vsub.f32 %v293, %v841
      %v843 = vand.u32 %v842, 4294901760
      %844 = vmatprep.subr.mxu0 %v843
      %v845 = vand.u32 %v292, 4294901760
      %v846 = vsub.f32 %v292, %v845
      %v847 = vand.u32 %v846, 4294901760
      %848 = vmatpush1.msra.mxu0 %v847
      %v849 = vand.u32 %v278, 4294901760
      %v850 = vsub.f32 %v278, %v849
      %v851 = vand.u32 %v850, 4294901760
      %852 = vmatprep.subr.mxu0 %v851
      %v853 = vand.u32 %v277, 4294901760
      %v854 = vsub.f32 %v277, %v853
      %v855 = vand.u32 %v854, 4294901760
      %856 = vmatpush1.msra.mxu0 %v855
      %v857 = vand.u32 %v263, 4294901760
      %v858 = vsub.f32 %v263, %v857
      %v859 = vand.u32 %v858, 4294901760
      %860 = vmatprep.subr.mxu0 %v859
      %v861 = vand.u32 %v262, 4294901760
      %v862 = vsub.f32 %v262, %v861
      %v863 = vand.u32 %v862, 4294901760
      %864 = vmatpush1.msra.mxu0 %v863
      %v865 = vand.u32 %v248, 4294901760
      %v866 = vsub.f32 %v248, %v865
      %v867 = vand.u32 %v866, 4294901760
      %868 = vmatprep.subr.mxu0 %v867
      %v869 = vand.u32 %v247, 4294901760
      %v870 = vsub.f32 %v247, %v869
      %v871 = vand.u32 %v870, 4294901760
      %872 = vmatpush1.msra.mxu0 %v871
      %v873 = vand.u32 %v233, 4294901760
      %v874 = vsub.f32 %v233, %v873
      %v875 = vand.u32 %v874, 4294901760
      %876 = vmatprep.subr.mxu0 %v875
      %v877 = vand.u32 %v232, 4294901760
      %v878 = vsub.f32 %v232, %v877
      %v879 = vand.u32 %v878, 4294901760
      %880 = vmatpush1.msra.mxu0 %v879
      %v881 = vsub.f32 %v211, %v211
      %v882 = vand.u32 %v881, 4294901760
      %883 = vmatprep.subr.mxu0 %v882
      %v884 = vsub.f32 %v210, %v210
      %v885 = vand.u32 %v884, 4294901760
      %886 = vmatpush1.msra.mxu0 %v885
      %887 = vmatprep.subr.mxu0 0.0
      %888 = vmatpush2.msra.mxu0 0.0
      %889 = vmatprep.subr.mxu0 0.0
      %890 = vmatpush2.msra.mxu0 0.0
      %891 = vmatprep.subr.mxu0 0.0
      %892 = vmatpush2.msra.mxu0 0.0
      %893 = vmatprep.subr.mxu0 0.0
      %894 = vmatpush2.msra.mxu0 0.0
      %895 = vmatprep.subr.mxu0 0.0
      %896 = vmatpush2.msra.mxu0 0.0
      %897 = vmatprep.subr.mxu0 0.0
      %898 = vmatpush2.msra.mxu0 0.0
      %899 = vmatprep.subr.mxu0 0.0
      %900 = vmatpush2.msra.mxu0 0.0
      %901 = vmatprep.subr.mxu0 0.0
      %902 = vmatpush2.msra.mxu0 0.0
      %903 = vmatprep.subr.mxu0 0.0
      %904 = vmatpush2.msra.mxu0 0.0
      %905 = vmatprep.subr.mxu0 0.0
      %906 = vmatpush2.msra.mxu0 0.0
      %907 = vmatprep.subr.mxu0 0.0
      %908 = vmatpush2.msra.mxu0 0.0
      %909 = vmatprep.subr.mxu0 0.0
      %910 = vmatpush2.msra.mxu0 0.0
      %911 = vmatprep.subr.mxu0 0.0
      %912 = vmatpush2.msra.mxu0 0.0
      %913 = vmatprep.subr.mxu0 0.0
      %914 = vmatpush2.msra.mxu0 0.0
      %915 = vmatprep.subr.mxu0 0.0
      %916 = vmatpush2.msra.mxu0 0.0
      %917 = vmatprep.subr.mxu0 0.0
      %918 = vmatpush2.msra.mxu0 0.0
      %919 = vmatprep.mubr.f32.mxu0 0.0
      %v920 = vand.u32 %v352, 4294901760
      %921 = vmatmul.mubr.f32.gmra.mxu0 %v920
      %v922 = vpop.f32.mrf.mxu0
      %v923 = vadd.f32 %v799, %v922
      %v924 = vpop.f32.mrf.mxu0
      %v925 = vadd.f32 %v801, %v924
      %926 = vdwg.mxu0
      %927 = vmatprep.subr.mxu0 0.0
      %928 = vmatpush1.msra.mxu0 0.0
      %929 = vmatprep.subr.mxu0 0.0
      %930 = vmatpush1.msra.mxu0 0.0
      %931 = vmatprep.subr.mxu0 0.0
      %932 = vmatpush1.msra.mxu0 0.0
      %933 = vmatprep.subr.mxu0 0.0
      %934 = vmatpush1.msra.mxu0 0.0
      %935 = vmatprep.subr.mxu0 0.0
      %936 = vmatpush1.msra.mxu0 0.0
      %937 = vmatprep.subr.mxu0 0.0
      %938 = vmatpush1.msra.mxu0 0.0
      %939 = vmatprep.subr.mxu0 0.0
      %940 = vmatpush1.msra.mxu0 0.0
      %v941 = vand.u32 %v338, 4294901760
      %942 = vmatprep.subr.mxu0 %v941
      %v943 = vand.u32 %v337, 4294901760
      %944 = vmatpush1.msra.mxu0 %v943
      %v945 = vand.u32 %v323, 4294901760
      %946 = vmatprep.subr.mxu0 %v945
      %v947 = vand.u32 %v322, 4294901760
      %948 = vmatpush1.msra.mxu0 %v947
      %v949 = vand.u32 %v308, 4294901760
      %950 = vmatprep.subr.mxu0 %v949
      %v951 = vand.u32 %v307, 4294901760
      %952 = vmatpush1.msra.mxu0 %v951
      %v953 = vand.u32 %v293, 4294901760
      %954 = vmatprep.subr.mxu0 %v953
      %v955 = vand.u32 %v292, 4294901760
      %956 = vmatpush1.msra.mxu0 %v955
      %v957 = vand.u32 %v278, 4294901760
      %958 = vmatprep.subr.mxu0 %v957
      %v959 = vand.u32 %v277, 4294901760
      %960 = vmatpush1.msra.mxu0 %v959
      %v961 = vand.u32 %v263, 4294901760
      %962 = vmatprep.subr.mxu0 %v961
      %v963 = vand.u32 %v262, 4294901760
      %964 = vmatpush1.msra.mxu0 %v963
      %v965 = vand.u32 %v248, 4294901760
      %966 = vmatprep.subr.mxu0 %v965
      %v967 = vand.u32 %v247, 4294901760
      %968 = vmatpush1.msra.mxu0 %v967
      %v969 = vand.u32 %v233, 4294901760
      %970 = vmatprep.subr.mxu0 %v969
      %v971 = vand.u32 %v232, 4294901760
      %972 = vmatpush1.msra.mxu0 %v971
      %973 = vmatprep.subr.mxu0 %v211
      %974 = vmatpush1.msra.mxu0 %v210
      %975 = vmatprep.subr.mxu0 0.0
      %976 = vmatpush2.msra.mxu0 0.0
      %977 = vmatprep.subr.mxu0 0.0
      %978 = vmatpush2.msra.mxu0 0.0
      %979 = vmatprep.subr.mxu0 0.0
      %980 = vmatpush2.msra.mxu0 0.0
      %981 = vmatprep.subr.mxu0 0.0
      %982 = vmatpush2.msra.mxu0 0.0
      %983 = vmatprep.subr.mxu0 0.0
      %984 = vmatpush2.msra.mxu0 0.0
      %985 = vmatprep.subr.mxu0 0.0
      %986 = vmatpush2.msra.mxu0 0.0
      %987 = vmatprep.subr.mxu0 0.0
      %988 = vmatpush2.msra.mxu0 0.0
      %989 = vmatprep.subr.mxu0 0.0
      %990 = vmatpush2.msra.mxu0 0.0
      %991 = vmatprep.subr.mxu0 0.0
      %992 = vmatpush2.msra.mxu0 0.0
      %993 = vmatprep.subr.mxu0 0.0
      %994 = vmatpush2.msra.mxu0 0.0
      %995 = vmatprep.subr.mxu0 0.0
      %996 = vmatpush2.msra.mxu0 0.0
      %997 = vmatprep.subr.mxu0 0.0
      %998 = vmatpush2.msra.mxu0 0.0
      %999 = vmatprep.subr.mxu0 0.0
      %1000 = vmatpush2.msra.mxu0 0.0
      %1001 = vmatprep.subr.mxu0 0.0
      %1002 = vmatpush2.msra.mxu0 0.0
      %1003 = vmatprep.subr.mxu0 0.0
      %1004 = vmatpush2.msra.mxu0 0.0
      %1005 = vmatprep.subr.mxu0 0.0
      %1006 = vmatpush2.msra.mxu0 0.0
      %1007 = vmatprep.mubr.f32.mxu0 0.0
      %v1008 = vand.u32 %v352, 4294901760
      %1009 = vmatmul.mubr.f32.gmra.mxu0 %v1008
      %v1010 = vpop.f32.mrf.mxu0
      %v1011 = vadd.f32 %v923, %v1010
      %v1012 = vpop.f32.mrf.mxu0
      %v1013 = vadd.f32 %v925, %v1012
      %1014 = vdwg.mxu0
      %1015 = vmatprep.subr.mxu0 0.0
      %1016 = vmatpush1.msra.mxu0 0.0
      %1017 = vmatprep.subr.mxu0 0.0
      %1018 = vmatpush1.msra.mxu0 0.0
      %1019 = vmatprep.subr.mxu0 0.0
      %1020 = vmatpush1.msra.mxu0 0.0
      %1021 = vmatprep.subr.mxu0 0.0
      %1022 = vmatpush1.msra.mxu0 0.0
      %1023 = vmatprep.subr.mxu0 0.0
      %1024 = vmatpush1.msra.mxu0 0.0
      %1025 = vmatprep.subr.mxu0 0.0
      %1026 = vmatpush1.msra.mxu0 0.0
      %1027 = vmatprep.subr.mxu0 0.0
      %1028 = vmatpush1.msra.mxu0 0.0
      %1029 = vmatprep.subr.mxu0 0.0
      %v1030 = vand.u32 %v339, 4294901760
      %1031 = vmatpush1.msra.mxu0 %v1030
      %1032 = vmatprep.subr.mxu0 0.0
      %v1033 = vand.u32 %v324, 4294901760
      %1034 = vmatpush1.msra.mxu0 %v1033
      %1035 = vmatprep.subr.mxu0 0.0
      %v1036 = vand.u32 %v309, 4294901760
      %1037 = vmatpush1.msra.mxu0 %v1036
      %1038 = vmatprep.subr.mxu0 0.0
      %v1039 = vand.u32 %v294, 4294901760
      %1040 = vmatpush1.msra.mxu0 %v1039
      %1041 = vmatprep.subr.mxu0 0.0
      %v1042 = vand.u32 %v279, 4294901760
      %1043 = vmatpush1.msra.mxu0 %v1042
      %1044 = vmatprep.subr.mxu0 0.0
      %v1045 = vand.u32 %v264, 4294901760
      %1046 = vmatpush1.msra.mxu0 %v1045
      %1047 = vmatprep.subr.mxu0 0.0
      %v1048 = vand.u32 %v249, 4294901760
      %1049 = vmatpush1.msra.mxu0 %v1048
      %1050 = vmatprep.subr.mxu0 0.0
      %v1051 = vand.u32 %v234, 4294901760
      %1052 = vmatpush1.msra.mxu0 %v1051
      %1053 = vmatprep.subr.mxu0 0.0
      %1054 = vmatpush1.msra.mxu0 %v212
      %1055 = vmatprep.subr.mxu0 0.0
      %1056 = vmatpush2.msra.mxu0 0.0
      %1057 = vmatprep.subr.mxu0 0.0
      %1058 = vmatpush2.msra.mxu0 0.0
      %1059 = vmatprep.subr.mxu0 0.0
      %1060 = vmatpush2.msra.mxu0 0.0
      %1061 = vmatprep.subr.mxu0 0.0
      %1062 = vmatpush2.msra.mxu0 0.0
      %1063 = vmatprep.subr.mxu0 0.0
      %1064 = vmatpush2.msra.mxu0 0.0
      %1065 = vmatprep.subr.mxu0 0.0
      %1066 = vmatpush2.msra.mxu0 0.0
      %1067 = vmatprep.subr.mxu0 0.0
      %1068 = vmatpush2.msra.mxu0 0.0
      %1069 = vmatprep.subr.mxu0 0.0
      %1070 = vmatpush2.msra.mxu0 0.0
      %1071 = vmatprep.subr.mxu0 0.0
      %1072 = vmatpush2.msra.mxu0 0.0
      %1073 = vmatprep.subr.mxu0 0.0
      %1074 = vmatpush2.msra.mxu0 0.0
      %1075 = vmatprep.subr.mxu0 0.0
      %1076 = vmatpush2.msra.mxu0 0.0
      %1077 = vmatprep.subr.mxu0 0.0
      %1078 = vmatpush2.msra.mxu0 0.0
      %1079 = vmatprep.subr.mxu0 0.0
      %1080 = vmatpush2.msra.mxu0 0.0
      %1081 = vmatprep.subr.mxu0 0.0
      %1082 = vmatpush2.msra.mxu0 0.0
      %1083 = vmatprep.subr.mxu0 0.0
      %1084 = vmatpush2.msra.mxu0 0.0
      %1085 = vmatprep.subr.mxu0 0.0
      %1086 = vmatpush2.msra.mxu0 0.0
      %1087 = vmatprep.mubr.f32.mxu0 0.0
      %v1088 = vand.u32 %v352, 4294901760
      %v1089 = vsub.f32 %v352, %v1088
      %v1090 = vand.u32 %v1089, 4294901760
      %v1091 = vsub.f32 %v1089, %v1090
      %v1092 = vand.u32 %v1091, 4294901760
      %1093 = vmatmul.mubr.f32.gmra.mxu0 %v1092
      %v1094 = vpop.f32.mrf.mxu0
      %v1095 = vadd.f32 %v348, %v1094
      %v1096 = vpop.f32.mrf.mxu0
      %1097 = vdwg.mxu0
      %1098 = vmatprep.subr.mxu0 0.0
      %1099 = vmatpush1.msra.mxu0 0.0
      %1100 = vmatprep.subr.mxu0 0.0
      %1101 = vmatpush1.msra.mxu0 0.0
      %1102 = vmatprep.subr.mxu0 0.0
      %1103 = vmatpush1.msra.mxu0 0.0
      %1104 = vmatprep.subr.mxu0 0.0
      %1105 = vmatpush1.msra.mxu0 0.0
      %1106 = vmatprep.subr.mxu0 0.0
      %1107 = vmatpush1.msra.mxu0 0.0
      %1108 = vmatprep.subr.mxu0 0.0
      %1109 = vmatpush1.msra.mxu0 0.0
      %1110 = vmatprep.subr.mxu0 0.0
      %1111 = vmatpush1.msra.mxu0 0.0
      %1112 = vmatprep.subr.mxu0 0.0
      %v1113 = vand.u32 %v339, 4294901760
      %v1114 = vsub.f32 %v339, %v1113
      %v1115 = vand.u32 %v1114, 4294901760
      %v1116 = vsub.f32 %v1114, %v1115
      %v1117 = vand.u32 %v1116, 4294901760
      %1118 = vmatpush1.msra.mxu0 %v1117
      %1119 = vmatprep.subr.mxu0 0.0
      %v1120 = vand.u32 %v324, 4294901760
      %v1121 = vsub.f32 %v324, %v1120
      %v1122 = vand.u32 %v1121, 4294901760
      %v1123 = vsub.f32 %v1121, %v1122
      %v1124 = vand.u32 %v1123, 4294901760
      %1125 = vmatpush1.msra.mxu0 %v1124
      %1126 = vmatprep.subr.mxu0 0.0
      %v1127 = vand.u32 %v309, 4294901760
      %v1128 = vsub.f32 %v309, %v1127
      %v1129 = vand.u32 %v1128, 4294901760
      %v1130 = vsub.f32 %v1128, %v1129
      %v1131 = vand.u32 %v1130, 4294901760
      %1132 = vmatpush1.msra.mxu0 %v1131
      %1133 = vmatprep.subr.mxu0 0.0
      %v1134 = vand.u32 %v294, 4294901760
      %v1135 = vsub.f32 %v294, %v1134
      %v1136 = vand.u32 %v1135, 4294901760
      %v1137 = vsub.f32 %v1135, %v1136
      %v1138 = vand.u32 %v1137, 4294901760
      %1139 = vmatpush1.msra.mxu0 %v1138
      %1140 = vmatprep.subr.mxu0 0.0
      %v1141 = vand.u32 %v279, 4294901760
      %v1142 = vsub.f32 %v279, %v1141
      %v1143 = vand.u32 %v1142, 4294901760
      %v1144 = vsub.f32 %v1142, %v1143
      %v1145 = vand.u32 %v1144, 4294901760
      %1146 = vmatpush1.msra.mxu0 %v1145
      %1147 = vmatprep.subr.mxu0 0.0
      %v1148 = vand.u32 %v264, 4294901760
      %v1149 = vsub.f32 %v264, %v1148
      %v1150 = vand.u32 %v1149, 4294901760
      %v1151 = vsub.f32 %v1149, %v1150
      %v1152 = vand.u32 %v1151, 4294901760
      %1153 = vmatpush1.msra.mxu0 %v1152
      %1154 = vmatprep.subr.mxu0 0.0
      %v1155 = vand.u32 %v249, 4294901760
      %v1156 = vsub.f32 %v249, %v1155
      %v1157 = vand.u32 %v1156, 4294901760
      %v1158 = vsub.f32 %v1156, %v1157
      %v1159 = vand.u32 %v1158, 4294901760
      %1160 = vmatpush1.msra.mxu0 %v1159
      %1161 = vmatprep.subr.mxu0 0.0
      %v1162 = vand.u32 %v234, 4294901760
      %v1163 = vsub.f32 %v234, %v1162
      %v1164 = vand.u32 %v1163, 4294901760
      %v1165 = vsub.f32 %v1163, %v1164
      %v1166 = vand.u32 %v1165, 4294901760
      %1167 = vmatpush1.msra.mxu0 %v1166
      %1168 = vmatprep.subr.mxu0 0.0
      %v1169 = vsub.f32 %v212, %v212
      %v1170 = vand.u32 %v1169, 4294901760
      %v1171 = vsub.f32 %v1169, %v1170
      %v1172 = vand.u32 %v1171, 4294901760
      %1173 = vmatpush1.msra.mxu0 %v1172
      %1174 = vmatprep.subr.mxu0 0.0
      %1175 = vmatpush2.msra.mxu0 0.0
      %1176 = vmatprep.subr.mxu0 0.0
      %1177 = vmatpush2.msra.mxu0 0.0
      %1178 = vmatprep.subr.mxu0 0.0
      %1179 = vmatpush2.msra.mxu0 0.0
      %1180 = vmatprep.subr.mxu0 0.0
      %1181 = vmatpush2.msra.mxu0 0.0
      %1182 = vmatprep.subr.mxu0 0.0
      %1183 = vmatpush2.msra.mxu0 0.0
      %1184 = vmatprep.subr.mxu0 0.0
      %1185 = vmatpush2.msra.mxu0 0.0
      %1186 = vmatprep.subr.mxu0 0.0
      %1187 = vmatpush2.msra.mxu0 0.0
      %1188 = vmatprep.subr.mxu0 0.0
      %1189 = vmatpush2.msra.mxu0 0.0
      %1190 = vmatprep.subr.mxu0 0.0
      %1191 = vmatpush2.msra.mxu0 0.0
      %1192 = vmatprep.subr.mxu0 0.0
      %1193 = vmatpush2.msra.mxu0 0.0
      %1194 = vmatprep.subr.mxu0 0.0
      %1195 = vmatpush2.msra.mxu0 0.0
      %1196 = vmatprep.subr.mxu0 0.0
      %1197 = vmatpush2.msra.mxu0 0.0
      %1198 = vmatprep.subr.mxu0 0.0
      %1199 = vmatpush2.msra.mxu0 0.0
      %1200 = vmatprep.subr.mxu0 0.0
      %1201 = vmatpush2.msra.mxu0 0.0
      %1202 = vmatprep.subr.mxu0 0.0
      %1203 = vmatpush2.msra.mxu0 0.0
      %1204 = vmatprep.subr.mxu0 0.0
      %1205 = vmatpush2.msra.mxu0 0.0
      %1206 = vmatprep.mubr.f32.mxu0 0.0
      %v1207 = vand.u32 %v352, 4294901760
      %1208 = vmatmul.mubr.f32.gmra.mxu0 %v1207
      %v1209 = vpop.f32.mrf.mxu0
      %v1210 = vadd.f32 %v1095, %v1209
      %v1211 = vpop.f32.mrf.mxu0
      %1212 = vdwg.mxu0
      %1213 = vmatprep.subr.mxu0 0.0
      %1214 = vmatpush1.msra.mxu0 0.0
      %1215 = vmatprep.subr.mxu0 0.0
      %1216 = vmatpush1.msra.mxu0 0.0
      %1217 = vmatprep.subr.mxu0 0.0
      %1218 = vmatpush1.msra.mxu0 0.0
      %1219 = vmatprep.subr.mxu0 0.0
      %1220 = vmatpush1.msra.mxu0 0.0
      %1221 = vmatprep.subr.mxu0 0.0
      %1222 = vmatpush1.msra.mxu0 0.0
      %1223 = vmatprep.subr.mxu0 0.0
      %1224 = vmatpush1.msra.mxu0 0.0
      %1225 = vmatprep.subr.mxu0 0.0
      %1226 = vmatpush1.msra.mxu0 0.0
      %1227 = vmatprep.subr.mxu0 0.0
      %v1228 = vand.u32 %v339, 4294901760
      %v1229 = vsub.f32 %v339, %v1228
      %1230 = vmatpush1.msra.mxu0 %v1229
      %1231 = vmatprep.subr.mxu0 0.0
      %v1232 = vand.u32 %v324, 4294901760
      %v1233 = vsub.f32 %v324, %v1232
      %1234 = vmatpush1.msra.mxu0 %v1233
      %1235 = vmatprep.subr.mxu0 0.0
      %v1236 = vand.u32 %v309, 4294901760
      %v1237 = vsub.f32 %v309, %v1236
      %1238 = vmatpush1.msra.mxu0 %v1237
      %1239 = vmatprep.subr.mxu0 0.0
      %v1240 = vand.u32 %v294, 4294901760
      %v1241 = vsub.f32 %v294, %v1240
      %1242 = vmatpush1.msra.mxu0 %v1241
      %1243 = vmatprep.subr.mxu0 0.0
      %v1244 = vand.u32 %v279, 4294901760
      %v1245 = vsub.f32 %v279, %v1244
      %1246 = vmatpush1.msra.mxu0 %v1245
      %1247 = vmatprep.subr.mxu0 0.0
      %v1248 = vand.u32 %v264, 4294901760
      %v1249 = vsub.f32 %v264, %v1248
      %1250 = vmatpush1.msra.mxu0 %v1249
      %1251 = vmatprep.subr.mxu0 0.0
      %v1252 = vand.u32 %v249, 4294901760
      %v1253 = vsub.f32 %v249, %v1252
      %1254 = vmatpush1.msra.mxu0 %v1253
      %1255 = vmatprep.subr.mxu0 0.0
      %v1256 = vand.u32 %v234, 4294901760
      %v1257 = vsub.f32 %v234, %v1256
      %1258 = vmatpush1.msra.mxu0 %v1257
      %1259 = vmatprep.subr.mxu0 0.0
      %v1260 = vsub.f32 %v212, %v212
      %1261 = vmatpush1.msra.mxu0 %v1260
      %1262 = vmatprep.subr.mxu0 0.0
      %1263 = vmatpush2.msra.mxu0 0.0
      %1264 = vmatprep.subr.mxu0 0.0
      %1265 = vmatpush2.msra.mxu0 0.0
      %1266 = vmatprep.subr.mxu0 0.0
      %1267 = vmatpush2.msra.mxu0 0.0
      %1268 = vmatprep.subr.mxu0 0.0
      %1269 = vmatpush2.msra.mxu0 0.0
      %1270 = vmatprep.subr.mxu0 0.0
      %1271 = vmatpush2.msra.mxu0 0.0
      %1272 = vmatprep.subr.mxu0 0.0
      %1273 = vmatpush2.msra.mxu0 0.0
      %1274 = vmatprep.subr.mxu0 0.0
      %1275 = vmatpush2.msra.mxu0 0.0
      %1276 = vmatprep.subr.mxu0 0.0
      %1277 = vmatpush2.msra.mxu0 0.0
      %1278 = vmatprep.subr.mxu0 0.0
      %1279 = vmatpush2.msra.mxu0 0.0
      %1280 = vmatprep.subr.mxu0 0.0
      %1281 = vmatpush2.msra.mxu0 0.0
      %1282 = vmatprep.subr.mxu0 0.0
      %1283 = vmatpush2.msra.mxu0 0.0
      %1284 = vmatprep.subr.mxu0 0.0
      %1285 = vmatpush2.msra.mxu0 0.0
      %1286 = vmatprep.subr.mxu0 0.0
      %1287 = vmatpush2.msra.mxu0 0.0
      %1288 = vmatprep.subr.mxu0 0.0
      %1289 = vmatpush2.msra.mxu0 0.0
      %1290 = vmatprep.subr.mxu0 0.0
      %1291 = vmatpush2.msra.mxu0 0.0
      %1292 = vmatprep.subr.mxu0 0.0
      %1293 = vmatpush2.msra.mxu0 0.0
      %1294 = vmatprep.mubr.f32.mxu0 0.0
      %v1295 = vand.u32 %v352, 4294901760
      %v1296 = vsub.f32 %v352, %v1295
      %1297 = vmatmul.mubr.f32.gmra.mxu0 %v1296
      %v1298 = vpop.f32.mrf.mxu0
      %v1299 = vadd.f32 %v1210, %v1298
      %v1300 = vpop.f32.mrf.mxu0
      %1301 = vdwg.mxu0
      %1302 = vmatprep.subr.mxu0 0.0
      %1303 = vmatpush1.msra.mxu0 0.0
      %1304 = vmatprep.subr.mxu0 0.0
      %1305 = vmatpush1.msra.mxu0 0.0
      %1306 = vmatprep.subr.mxu0 0.0
      %1307 = vmatpush1.msra.mxu0 0.0
      %1308 = vmatprep.subr.mxu0 0.0
      %1309 = vmatpush1.msra.mxu0 0.0
      %1310 = vmatprep.subr.mxu0 0.0
      %1311 = vmatpush1.msra.mxu0 0.0
      %1312 = vmatprep.subr.mxu0 0.0
      %1313 = vmatpush1.msra.mxu0 0.0
      %1314 = vmatprep.subr.mxu0 0.0
      %1315 = vmatpush1.msra.mxu0 0.0
      %1316 = vmatprep.subr.mxu0 0.0
      %v1317 = vand.u32 %v339, 4294901760
      %1318 = vmatpush1.msra.mxu0 %v1317
      %1319 = vmatprep.subr.mxu0 0.0
      %v1320 = vand.u32 %v324, 4294901760
      %1321 = vmatpush1.msra.mxu0 %v1320
      %1322 = vmatprep.subr.mxu0 0.0
      %v1323 = vand.u32 %v309, 4294901760
      %1324 = vmatpush1.msra.mxu0 %v1323
      %1325 = vmatprep.subr.mxu0 0.0
      %v1326 = vand.u32 %v294, 4294901760
      %1327 = vmatpush1.msra.mxu0 %v1326
      %1328 = vmatprep.subr.mxu0 0.0
      %v1329 = vand.u32 %v279, 4294901760
      %1330 = vmatpush1.msra.mxu0 %v1329
      %1331 = vmatprep.subr.mxu0 0.0
      %v1332 = vand.u32 %v264, 4294901760
      %1333 = vmatpush1.msra.mxu0 %v1332
      %1334 = vmatprep.subr.mxu0 0.0
      %v1335 = vand.u32 %v249, 4294901760
      %1336 = vmatpush1.msra.mxu0 %v1335
      %1337 = vmatprep.subr.mxu0 0.0
      %v1338 = vand.u32 %v234, 4294901760
      %1339 = vmatpush1.msra.mxu0 %v1338
      %1340 = vmatprep.subr.mxu0 0.0
      %1341 = vmatpush1.msra.mxu0 %v212
      %1342 = vmatprep.subr.mxu0 0.0
      %1343 = vmatpush2.msra.mxu0 0.0
      %1344 = vmatprep.subr.mxu0 0.0
      %1345 = vmatpush2.msra.mxu0 0.0
      %1346 = vmatprep.subr.mxu0 0.0
      %1347 = vmatpush2.msra.mxu0 0.0
      %1348 = vmatprep.subr.mxu0 0.0
      %1349 = vmatpush2.msra.mxu0 0.0
      %1350 = vmatprep.subr.mxu0 0.0
      %1351 = vmatpush2.msra.mxu0 0.0
      %1352 = vmatprep.subr.mxu0 0.0
      %1353 = vmatpush2.msra.mxu0 0.0
      %1354 = vmatprep.subr.mxu0 0.0
      %1355 = vmatpush2.msra.mxu0 0.0
      %1356 = vmatprep.subr.mxu0 0.0
      %1357 = vmatpush2.msra.mxu0 0.0
      %1358 = vmatprep.subr.mxu0 0.0
      %1359 = vmatpush2.msra.mxu0 0.0
      %1360 = vmatprep.subr.mxu0 0.0
      %1361 = vmatpush2.msra.mxu0 0.0
      %1362 = vmatprep.subr.mxu0 0.0
      %1363 = vmatpush2.msra.mxu0 0.0
      %1364 = vmatprep.subr.mxu0 0.0
      %1365 = vmatpush2.msra.mxu0 0.0
      %1366 = vmatprep.subr.mxu0 0.0
      %1367 = vmatpush2.msra.mxu0 0.0
      %1368 = vmatprep.subr.mxu0 0.0
      %1369 = vmatpush2.msra.mxu0 0.0
      %1370 = vmatprep.subr.mxu0 0.0
      %1371 = vmatpush2.msra.mxu0 0.0
      %1372 = vmatprep.subr.mxu0 0.0
      %1373 = vmatpush2.msra.mxu0 0.0
      %1374 = vmatprep.mubr.f32.mxu0 0.0
      %v1375 = vand.u32 %v352, 4294901760
      %v1376 = vsub.f32 %v352, %v1375
      %v1377 = vand.u32 %v1376, 4294901760
      %1378 = vmatmul.mubr.f32.gmra.mxu0 %v1377
      %v1379 = vpop.f32.mrf.mxu0
      %v1380 = vadd.f32 %v1299, %v1379
      %v1381 = vpop.f32.mrf.mxu0
      %1382 = vdwg.mxu0
      %1383 = vmatprep.subr.mxu0 0.0
      %1384 = vmatpush1.msra.mxu0 0.0
      %1385 = vmatprep.subr.mxu0 0.0
      %1386 = vmatpush1.msra.mxu0 0.0
      %1387 = vmatprep.subr.mxu0 0.0
      %1388 = vmatpush1.msra.mxu0 0.0
      %1389 = vmatprep.subr.mxu0 0.0
      %1390 = vmatpush1.msra.mxu0 0.0
      %1391 = vmatprep.subr.mxu0 0.0
      %1392 = vmatpush1.msra.mxu0 0.0
      %1393 = vmatprep.subr.mxu0 0.0
      %1394 = vmatpush1.msra.mxu0 0.0
      %1395 = vmatprep.subr.mxu0 0.0
      %1396 = vmatpush1.msra.mxu0 0.0
      %1397 = vmatprep.subr.mxu0 0.0
      %v1398 = vand.u32 %v339, 4294901760
      %v1399 = vsub.f32 %v339, %v1398
      %v1400 = vand.u32 %v1399, 4294901760
      %1401 = vmatpush1.msra.mxu0 %v1400
      %1402 = vmatprep.subr.mxu0 0.0
      %v1403 = vand.u32 %v324, 4294901760
      %v1404 = vsub.f32 %v324, %v1403
      %v1405 = vand.u32 %v1404, 4294901760
      %1406 = vmatpush1.msra.mxu0 %v1405
      %1407 = vmatprep.subr.mxu0 0.0
      %v1408 = vand.u32 %v309, 4294901760
      %v1409 = vsub.f32 %v309, %v1408
      %v1410 = vand.u32 %v1409, 4294901760
      %1411 = vmatpush1.msra.mxu0 %v1410
      %1412 = vmatprep.subr.mxu0 0.0
      %v1413 = vand.u32 %v294, 4294901760
      %v1414 = vsub.f32 %v294, %v1413
      %v1415 = vand.u32 %v1414, 4294901760
      %1416 = vmatpush1.msra.mxu0 %v1415
      %1417 = vmatprep.subr.mxu0 0.0
      %v1418 = vand.u32 %v279, 4294901760
      %v1419 = vsub.f32 %v279, %v1418
      %v1420 = vand.u32 %v1419, 4294901760
      %1421 = vmatpush1.msra.mxu0 %v1420
      %1422 = vmatprep.subr.mxu0 0.0
      %v1423 = vand.u32 %v264, 4294901760
      %v1424 = vsub.f32 %v264, %v1423
      %v1425 = vand.u32 %v1424, 4294901760
      %1426 = vmatpush1.msra.mxu0 %v1425
      %1427 = vmatprep.subr.mxu0 0.0
      %v1428 = vand.u32 %v249, 4294901760
      %v1429 = vsub.f32 %v249, %v1428
      %v1430 = vand.u32 %v1429, 4294901760
      %1431 = vmatpush1.msra.mxu0 %v1430
      %1432 = vmatprep.subr.mxu0 0.0
      %v1433 = vand.u32 %v234, 4294901760
      %v1434 = vsub.f32 %v234, %v1433
      %v1435 = vand.u32 %v1434, 4294901760
      %1436 = vmatpush1.msra.mxu0 %v1435
      %1437 = vmatprep.subr.mxu0 0.0
      %v1438 = vsub.f32 %v212, %v212
      %v1439 = vand.u32 %v1438, 4294901760
      %1440 = vmatpush1.msra.mxu0 %v1439
      %1441 = vmatprep.subr.mxu0 0.0
      %1442 = vmatpush2.msra.mxu0 0.0
      %1443 = vmatprep.subr.mxu0 0.0
      %1444 = vmatpush2.msra.mxu0 0.0
      %1445 = vmatprep.subr.mxu0 0.0
      %1446 = vmatpush2.msra.mxu0 0.0
      %1447 = vmatprep.subr.mxu0 0.0
      %1448 = vmatpush2.msra.mxu0 0.0
      %1449 = vmatprep.subr.mxu0 0.0
      %1450 = vmatpush2.msra.mxu0 0.0
      %1451 = vmatprep.subr.mxu0 0.0
      %1452 = vmatpush2.msra.mxu0 0.0
      %1453 = vmatprep.subr.mxu0 0.0
      %1454 = vmatpush2.msra.mxu0 0.0
      %1455 = vmatprep.subr.mxu0 0.0
      %1456 = vmatpush2.msra.mxu0 0.0
      %1457 = vmatprep.subr.mxu0 0.0
      %1458 = vmatpush2.msra.mxu0 0.0
      %1459 = vmatprep.subr.mxu0 0.0
      %1460 = vmatpush2.msra.mxu0 0.0
      %1461 = vmatprep.subr.mxu0 0.0
      %1462 = vmatpush2.msra.mxu0 0.0
      %1463 = vmatprep.subr.mxu0 0.0
      %1464 = vmatpush2.msra.mxu0 0.0
      %1465 = vmatprep.subr.mxu0 0.0
      %1466 = vmatpush2.msra.mxu0 0.0
      %1467 = vmatprep.subr.mxu0 0.0
      %1468 = vmatpush2.msra.mxu0 0.0
      %1469 = vmatprep.subr.mxu0 0.0
      %1470 = vmatpush2.msra.mxu0 0.0
      %1471 = vmatprep.subr.mxu0 0.0
      %1472 = vmatpush2.msra.mxu0 0.0
      %1473 = vmatprep.mubr.f32.mxu0 0.0
      %v1474 = vand.u32 %v352, 4294901760
      %1475 = vmatmul.mubr.f32.gmra.mxu0 %v1474
      %v1476 = vpop.f32.mrf.mxu0
      %v1477 = vadd.f32 %v1380, %v1476
      %v1478 = vpop.f32.mrf.mxu0
      %1479 = vdwg.mxu0
      %1480 = vmatprep.subr.mxu0 0.0
      %1481 = vmatpush1.msra.mxu0 0.0
      %1482 = vmatprep.subr.mxu0 0.0
      %1483 = vmatpush1.msra.mxu0 0.0
      %1484 = vmatprep.subr.mxu0 0.0
      %1485 = vmatpush1.msra.mxu0 0.0
      %1486 = vmatprep.subr.mxu0 0.0
      %1487 = vmatpush1.msra.mxu0 0.0
      %1488 = vmatprep.subr.mxu0 0.0
      %1489 = vmatpush1.msra.mxu0 0.0
      %1490 = vmatprep.subr.mxu0 0.0
      %1491 = vmatpush1.msra.mxu0 0.0
      %1492 = vmatprep.subr.mxu0 0.0
      %1493 = vmatpush1.msra.mxu0 0.0
      %1494 = vmatprep.subr.mxu0 0.0
      %v1495 = vand.u32 %v339, 4294901760
      %1496 = vmatpush1.msra.mxu0 %v1495
      %1497 = vmatprep.subr.mxu0 0.0
      %v1498 = vand.u32 %v324, 4294901760
      %1499 = vmatpush1.msra.mxu0 %v1498
      %1500 = vmatprep.subr.mxu0 0.0
      %v1501 = vand.u32 %v309, 4294901760
      %1502 = vmatpush1.msra.mxu0 %v1501
      %1503 = vmatprep.subr.mxu0 0.0
      %v1504 = vand.u32 %v294, 4294901760
      %1505 = vmatpush1.msra.mxu0 %v1504
      %1506 = vmatprep.subr.mxu0 0.0
      %v1507 = vand.u32 %v279, 4294901760
      %1508 = vmatpush1.msra.mxu0 %v1507
      %1509 = vmatprep.subr.mxu0 0.0
      %v1510 = vand.u32 %v264, 4294901760
      %1511 = vmatpush1.msra.mxu0 %v1510
      %1512 = vmatprep.subr.mxu0 0.0
      %v1513 = vand.u32 %v249, 4294901760
      %1514 = vmatpush1.msra.mxu0 %v1513
      %1515 = vmatprep.subr.mxu0 0.0
      %v1516 = vand.u32 %v234, 4294901760
      %1517 = vmatpush1.msra.mxu0 %v1516
      %1518 = vmatprep.subr.mxu0 0.0
      %1519 = vmatpush1.msra.mxu0 %v212
      %1520 = vmatprep.subr.mxu0 0.0
      %1521 = vmatpush2.msra.mxu0 0.0
      %1522 = vmatprep.subr.mxu0 0.0
      %1523 = vmatpush2.msra.mxu0 0.0
      %1524 = vmatprep.subr.mxu0 0.0
      %1525 = vmatpush2.msra.mxu0 0.0
      %1526 = vmatprep.subr.mxu0 0.0
      %1527 = vmatpush2.msra.mxu0 0.0
      %1528 = vmatprep.subr.mxu0 0.0
      %1529 = vmatpush2.msra.mxu0 0.0
      %1530 = vmatprep.subr.mxu0 0.0
      %1531 = vmatpush2.msra.mxu0 0.0
      %1532 = vmatprep.subr.mxu0 0.0
      %1533 = vmatpush2.msra.mxu0 0.0
      %1534 = vmatprep.subr.mxu0 0.0
      %1535 = vmatpush2.msra.mxu0 0.0
      %1536 = vmatprep.subr.mxu0 0.0
      %1537 = vmatpush2.msra.mxu0 0.0
      %1538 = vmatprep.subr.mxu0 0.0
      %1539 = vmatpush2.msra.mxu0 0.0
      %1540 = vmatprep.subr.mxu0 0.0
      %1541 = vmatpush2.msra.mxu0 0.0
      %1542 = vmatprep.subr.mxu0 0.0
      %1543 = vmatpush2.msra.mxu0 0.0
      %1544 = vmatprep.subr.mxu0 0.0
      %1545 = vmatpush2.msra.mxu0 0.0
      %1546 = vmatprep.subr.mxu0 0.0
      %1547 = vmatpush2.msra.mxu0 0.0
      %1548 = vmatprep.subr.mxu0 0.0
      %1549 = vmatpush2.msra.mxu0 0.0
      %1550 = vmatprep.subr.mxu0 0.0
      %1551 = vmatpush2.msra.mxu0 0.0
      %1552 = vmatprep.mubr.f32.mxu0 0.0
      %v1553 = vand.u32 %v352, 4294901760
      %1554 = vmatmul.mubr.f32.gmra.mxu0 %v1553
      %v1555 = vpop.f32.mrf.mxu0
      %v1556 = vadd.f32 %v1477, %v1555
      %v1557 = vpop.f32.mrf.mxu0
      %1558 = vdwg.mxu0
      %v1559 = vmax.f32 %v1011, -1.0
      %v1560 = vmax.f32 %v1013, -1.0
      %v1561 = vmax.f32 %v1556, -1.0
      %v1562 = vmin.f32 %v1559, 1.0
      %v1563 = vmin.f32 %v1560, 1.0
      %v1564 = vmin.f32 %v1561, 1.0
      %1565 = vst [vmem:[%s206] sm:$0xff] %v1562
      %1566 = vst [vmem:[%s206 + $0x8] sm:$0xff] %v1563
      %1567 = vst [vmem:[%s206 + $0x10] sm:$0xff] %v1564
      %s1568 = smul.u32 3, %s19
      %p1569 = scmp.lt.s32.totalorder %s18, 1
      %s1570 = scalar_select %p1569, %s18, 1
      %p1571 = scmp.lt.s32.totalorder %s1568, 2
      %s1572 = scalar_select %p1571, %s1568, 2
      %s1573 = smul.addr %s1570, 3
      %s1574 = sadd.s32 %s1572, %s1573
      %s1575 = smul.addr %s1574, 8
      %s1576 = scalar_lea.vmem %s3, %s1575
      // Predicated region
      $region33: #{conffusion_forward.1} parent=31 // pred_check
        %p1577 = pneg %p116
      $region34: #{conffusion_forward.1} parent=31 // pred_check_branch
        %1579 = sbr.rel (%p1577) target = $region36
      $region35: #{conffusion_forward.1} parent=31 // pred_region
        %s1580 = smul.u32 3, %s19
      $region36: #{conffusion_forward.1} parent=31 // pred_fallthru
        _
    $region32: #{conffusion_forward.1} parent=5 // pred_fallthru
      _
    %p1581 = scmp.le.s32.totalorder 2, %s9
    // Predicated region
    $region37: #{conffusion_forward.1} parent=5 // pred_check
      %p1582 = pneg %p1581
    $region38: #{conffusion_forward.1} parent=5 // pred_check_branch
      %1584 = sbr.rel (%p1582) target = $region40
    $region39: #{conffusion_forward.1} parent=5 // pred_region
      %s1585 = ssub.s32 %s9, 2
      // Predicated region
      $region41: #{conffusion_forward.1} parent=39 // pred_check
        %p1586 = pneg %p122
      $region42: #{conffusion_forward.1} parent=39 // pred_check_branch
        %1588 = sbr.rel (%p1586) target = $region44
      $region43: #{conffusion_forward.1} parent=39 // pred_region
        %s1589 = smul.u32 3, %s21
        %p1590 = scmp.lt.s32.totalorder %s20, 1
        %s1591 = scalar_select %p1590, %s20, 1
        %p1592 = scmp.lt.s32.totalorder %s1589, 2
        %s1593 = scalar_select %p1592, %s1589, 2
        %s1594 = smul.addr %s1591, 3
        %s1595 = sadd.s32 %s1593, %s1594
        %s1596 = smul.addr %s1595, 8
        %s1597 = scalar_lea.vmem %s3, %s1596
      $region44: #{conffusion_forward.1} parent=39 // pred_fallthru
        _
    $region40: #{conffusion_forward.1} parent=5 // pred_fallthru
      _
  $region6: #{conffusion_forward.1} parent=0 // loop_footer
    %s13 = sadd.s32 1, %s9
  $region7: #{conffusion_forward.1} parent=0 // loop_footer_branch
    %8 = sbr.rel target = $region3
  $region8: #{conffusion_forward.1} parent=0 // loop_exit
    _

</llo_original>
